<compile_context>
chip_gen: v6e
topology: v6e:2x2x1
jax: 0.10.0
libtpu: 0.0.40
codegen_flags: <defaults>
</compile_context>

<pallas_src>
import functools

import numpy as np

import jax
import jax.numpy as jnp
from jax.experimental import pallas as pl
from jax.experimental.pallas import tpu as pltpu


# --------------------------------------------------------------------------- #
# Shared gate MLP (both branches batched as the 2 columns avg / max).  fp32.
# --------------------------------------------------------------------------- #
def _gates(psum_a, pmax_a, psum_m, pmax_m,
           wf1a, wf1m, bf1, wf2a, wf2m, bf2a, bf2m, inv_hw):
    """Returns (ga [K,1], gm [Cm,1]): per-channel gates g = x1 + x2."""
    pooled_a = jnp.concatenate([psum_a * inv_hw, pmax_a], axis=1)    # [K, 2]
    pooled_m = jnp.concatenate([psum_m * inv_hw, pmax_m], axis=1)    # [Cm, 2]
    h = (jnp.dot(wf1a, pooled_a, preferred_element_type=jnp.float32)
         + jnp.dot(wf1m, pooled_m, preferred_element_type=jnp.float32)
         + bf1)                                                      # [C, 2]
    h = jnp.maximum(h, 0.0)
    ga = jnp.sum(jax.nn.sigmoid(
        jnp.dot(wf2a, h, preferred_element_type=jnp.float32) + bf2a),
        axis=1, keepdims=True)                                       # [K, 1]
    gm = jnp.sum(jax.nn.sigmoid(
        jnp.dot(wf2m, h, preferred_element_type=jnp.float32) + bf2m),
        axis=1, keepdims=True)                                       # [Cm, 1]
    return ga, gm


# --------------------------------------------------------------------------- #
# Path A: single pass, whole per-batch slabs resident in VMEM (grid = (N,)).
# --------------------------------------------------------------------------- #
def _aaff_single_kernel(x_ref, mt_ref, wc2_ref, wc2a_ref, wc2m_ref,
                        wf1a_ref, wf1m_ref, bf1_ref,
                        wf2a_ref, wf2m_ref, bf2a_ref, bf2m_ref,
                        o_ref,
                        psum_a, pmax_a, psum_m, pmax_m,
                        *, chunk, nchunks, inv_hw, compute_dtype):
    # x_ref: [Cin, HW]   mt_ref: [Cm, HW]   o_ref: [K, HW]   (batch squeezed)
    wc2 = wc2_ref[...]          # [K, Cin]  compute_dtype (pre-cast in wrapper)
    wc2a = wc2a_ref[...]        # [K, K]
    wc2m = wc2m_ref[...]        # [K, Cm]

    psum_a[...] = jnp.zeros_like(psum_a)
    psum_m[...] = jnp.zeros_like(psum_m)
    pmax_a[...] = jnp.full_like(pmax_a, -jnp.inf)
    pmax_m[...] = jnp.full_like(pmax_m, -jnp.inf)

    # Pass 1 (VMEM only): global avg/max pools of [a ; mt], chunked over HW.
    @pl.loop(0, nchunks)
    def _pool(i):
        off = pl.multiple_of(i * chunk, chunk)
        x_c = x_ref[:, pl.ds(off, chunk)]
        a_c = jnp.dot(wc2, x_c, preferred_element_type=jnp.float32)  # [K, chunk] f32
        mt_c = mt_ref[:, pl.ds(off, chunk)].astype(jnp.float32)
        psum_a[...] += jnp.sum(a_c, axis=1, keepdims=True)
        pmax_a[...] = jnp.maximum(pmax_a[...],
                                  jnp.max(a_c, axis=1, keepdims=True))
        psum_m[...] += jnp.sum(mt_c, axis=1, keepdims=True)
        pmax_m[...] = jnp.maximum(pmax_m[...],
                                  jnp.max(mt_c, axis=1, keepdims=True))

    # Gate MLPs (tiny, fp32).
    ga, gm = _gates(psum_a[...], pmax_a[...], psum_m[...], pmax_m[...],
                    wf1a_ref[...], wf1m_ref[...], bf1_ref[...],
                    wf2a_ref[...], wf2m_ref[...], bf2a_ref[...], bf2m_ref[...],
                    inv_hw)
    gm_c = gm.astype(compute_dtype)

    # Pass 2 (VMEM only): out = wc2_a @ (ga * a) + wc2_m @ (gm * mt).
    @pl.loop(0, nchunks)
    def _apply(i):
        off = pl.multiple_of(i * chunk, chunk)
        x_c = x_ref[:, pl.ds(off, chunk)]
        a_c = jnp.dot(wc2, x_c, preferred_element_type=jnp.float32)
        sa = (a_c * ga).astype(compute_dtype)                        # [K, chunk]
        sm = mt_ref[:, pl.ds(off, chunk)] * gm_c                     # [Cm, chunk]
        out_c = (jnp.dot(wc2a, sa, preferred_element_type=jnp.float32)
                 + jnp.dot(wc2m, sm, preferred_element_type=jnp.float32))
        o_ref[:, pl.ds(off, chunk)] = out_c.astype(o_ref.dtype)


# --------------------------------------------------------------------------- #
# Path B: two-phase streaming fallback (grid = (N, 2, nt)).
# --------------------------------------------------------------------------- #
def _aaff_stream_kernel(x_ref, mt_ref, wc2_ref, wc2a_ref, wc2m_ref,
                        wf1a_ref, wf1m_ref, bf1_ref,
                        wf2a_ref, wf2m_ref, bf2a_ref, bf2m_ref,
                        o_ref,
                        psum_a, pmax_a, psum_m, pmax_m, ga_ref, gm_ref,
                        *, inv_hw, compute_dtype):
    p = pl.program_id(1)          # 0 = pool phase, 1 = apply phase
    t = pl.program_id(2)
    nt = pl.num_programs(2)

    @pl.when(p == 0)
    def _pool_phase():
        @pl.when(t == 0)
        def _init():
            psum_a[...] = jnp.zeros_like(psum_a)
            psum_m[...] = jnp.zeros_like(psum_m)
            pmax_a[...] = jnp.full_like(pmax_a, -jnp.inf)
            pmax_m[...] = jnp.full_like(pmax_m, -jnp.inf)

        a_t = jnp.dot(wc2_ref[...], x_ref[...],
                      preferred_element_type=jnp.float32)             # [K, T] f32
        mt_f = mt_ref[...].astype(jnp.float32)
        psum_a[...] += jnp.sum(a_t, axis=1, keepdims=True)
        pmax_a[...] = jnp.maximum(pmax_a[...],
                                  jnp.max(a_t, axis=1, keepdims=True))
        psum_m[...] += jnp.sum(mt_f, axis=1, keepdims=True)
        pmax_m[...] = jnp.maximum(pmax_m[...],
                                  jnp.max(mt_f, axis=1, keepdims=True))

        @pl.when(t == nt - 1)
        def _gate():
            ga, gm = _gates(psum_a[...], pmax_a[...], psum_m[...], pmax_m[...],
                            wf1a_ref[...], wf1m_ref[...], bf1_ref[...],
                            wf2a_ref[...], wf2m_ref[...], bf2a_ref[...],
                            bf2m_ref[...], inv_hw)
            ga_ref[...] = ga
            gm_ref[...] = gm

    @pl.when(p == 1)
    def _apply_phase():
        a_t = jnp.dot(wc2_ref[...], x_ref[...],
                      preferred_element_type=jnp.float32)
        sa = (a_t * ga_ref[...]).astype(compute_dtype)
        sm = mt_ref[...] * gm_ref[...].astype(mt_ref.dtype)
        out = (jnp.dot(wc2a_ref[...], sa, preferred_element_type=jnp.float32)
               + jnp.dot(wc2m_ref[...], sm, preferred_element_type=jnp.float32))
        o_ref[...] = out.astype(o_ref.dtype)                          # lane-dense


# --------------------------------------------------------------------------- #
# Wrapper
# --------------------------------------------------------------------------- #
def _physical_vmem_bytes():
    try:
        info = pltpu.get_tpu_info()
        for name in ("vmem_capacity_bytes", "vmem_size_bytes"):
            v = int(getattr(info, name, 0) or 0)
            if v > 0:
                return v
    except Exception:
        pass
    return 64 << 20     # conservative default (v7x-sized)


def _largest_divisor_tile(hw, cap, multiple=128):
    """Largest multiple-of-`multiple` divisor of hw that is <= cap (else hw)."""
    cap = max(multiple, min(cap, hw))
    t = (cap // multiple) * multiple
    while t >= multiple:
        if hw % t == 0:
            return t
        t -= multiple
    return hw


def aaff_forward(x_nchw, mt_nchw, w_cov2, w_fc1, b_fc1, w_fc2, b_fc2,
                 *, compute_dtype=jnp.float32, tile_hw=None,
                 force_streaming=False):
    N, Cin, H, W = x_nchw.shape
    K = w_cov2.shape[0]                 # internal_neurons
    Cm = mt_nchw.shape[1]
    C = K + Cm
    assert C == Cin, "internal_neurons + mt channels must equal input_channels"
    HW = H * W
    inv_hw = 1.0 / HW
    itemsize = np.dtype(compute_dtype).itemsize

    # Channels-first, spatially flattened: pure reshape of NCHW (no transpose).
    # Cast to the streaming dtype in the wrapper so HBM traffic is already
    # narrow (bf16 halves bytes) and no full-tile casts happen per grid step.
    x = x_nchw.reshape(N, Cin, HW).astype(compute_dtype)
    mt = mt_nchw.reshape(N, Cm, HW).astype(compute_dtype)

    # 1x1-conv weights in (out, in) form; split at the a/mt channel boundary
    # in the wrapper so the kernel never slices / transposes / re-casts them.
    wc2 = w_cov2.reshape(K, Cin).astype(compute_dtype)
    wc2_a, wc2_m = wc2[:, :K], wc2[:, K:]
    wf1 = w_fc1.reshape(C, C).astype(jnp.float32)
    wf1_a, wf1_m = wf1[:, :K], wf1[:, K:]
    wf2 = w_fc2.reshape(C, C).astype(jnp.float32)
    wf2_a, wf2_m = wf2[:K, :], wf2[K:, :]
    bf1 = b_fc1.reshape(C, 1).astype(jnp.float32)
    bf2 = b_fc2.reshape(C, 1).astype(jnp.float32)
    bf2_a, bf2_m = bf2[:K, :], bf2[K:, :]
    weight_args = (wc2, wc2_a, wc2_m, wf1_a, wf1_m, bf1,
                   wf2_a, wf2_m, bf2_a, bf2_m)

    phys_vmem = _physical_vmem_bytes()

    # ----- single-pass feasibility (generation-aware VMEM budget) ----------- #
    chunk = _largest_divisor_tile(HW, cap=1024)
    nchunks = max(1, HW // chunk) if HW % chunk == 0 else 1
    if HW % chunk != 0:
        chunk, nchunks = HW, 1
    weights_bytes = 2 * sum(int(np.prod(w.shape)) * np.dtype(w.dtype).itemsize
                            for w in weight_args)
    transient_bytes = 6 * (Cin + Cm + 2 * K) * chunk * 4
    single_need = (2 * (Cin + Cm + K) * HW * itemsize       # dbl-buffered blocks
                   + weights_bytes + transient_bytes + (2 << 20))
    single_budget = min(int(phys_vmem * 0.6), 80 << 20)     # 64 MiB-safe on v7x
    use_single = ((not force_streaming) and (tile_hw is None)
                  and single_need <= single_budget)

    if use_single:
        vmem_limit = int(min(phys_vmem * 0.9,
                             max(single_need + (8 << 20), 32 << 20)))
        kernel = functools.partial(_aaff_single_kernel, chunk=chunk,
                                   nchunks=nchunks, inv_hw=inv_hw,
                                   compute_dtype=compute_dtype)
        out = pl.pallas_call(
            kernel,
            out_shape=jax.ShapeDtypeStruct((N, K, HW), x.dtype),
            grid_spec=pltpu.PrefetchScalarGridSpec(
                num_scalar_prefetch=0,
                grid=(N,),
                in_specs=[
                    pl.BlockSpec((pl.Squeezed(), Cin, HW), lambda n: (n, 0, 0)),
                    pl.BlockSpec((pl.Squeezed(), Cm, HW), lambda n: (n, 0, 0)),
                ] + [pl.BlockSpec(w.shape, lambda n: (0, 0))
                     for w in weight_args],
                out_specs=pl.BlockSpec((pl.Squeezed(), K, HW),
                                       lambda n: (n, 0, 0)),
                scratch_shapes=[
                    pltpu.VMEM((K, 1), jnp.float32),    # running sum (a rows)
                    pltpu.VMEM((K, 1), jnp.float32),    # running max (a rows)
                    pltpu.VMEM((Cm, 1), jnp.float32),   # running sum (mt rows)
                    pltpu.VMEM((Cm, 1), jnp.float32),   # running max (mt rows)
                ],
            ),
            compiler_params=pltpu.CompilerParams(
                dimension_semantics=("parallel",),
                vmem_limit_bytes=vmem_limit),
        )(x, mt, *weight_args)
        return out.reshape(N, K, H, W)

    # ----- streaming fallback: two-phase (pool, apply) over HW tiles -------- #
    if tile_hw is None:
        # MiB-class blocks per grid step (not a fixed 512-lane cap): target a
        # few MiB of double-buffered x/mt/out traffic per step.
        per_lane = max(1, (Cin + Cm + K) * itemsize)
        tile_cap = max(512, (6 << 20) // (2 * per_lane))
        tile_hw = _largest_divisor_tile(HW, cap=tile_cap)
    assert HW % tile_hw == 0, "H*W must be divisible by tile_hw"
    nt = HW // tile_hw

    vmem_limit = int(min(phys_vmem * 0.85,
                         max(2 * (Cin + Cm + K) * tile_hw * itemsize + (24 << 20),
                             32 << 20)))
    kernel = functools.partial(_aaff_stream_kernel, inv_hw=inv_hw,
                               compute_dtype=compute_dtype)
    out = pl.pallas_call(
        kernel,
        out_shape=jax.ShapeDtypeStruct((N, K, HW), x.dtype),
        grid_spec=pltpu.PrefetchScalarGridSpec(
            num_scalar_prefetch=0,
            grid=(N, 2, nt),                     # (batch, phase, hw tile)
            in_specs=[
                pl.BlockSpec((pl.Squeezed(), Cin, tile_hw),
                             lambda n, p, t: (n, 0, t)),
                pl.BlockSpec((pl.Squeezed(), Cm, tile_hw),
                             lambda n, p, t: (n, 0, t)),
            ] + [pl.BlockSpec(w.shape, lambda n, p, t: (0, 0))
                 for w in weight_args],
            # During the pool phase (p=0) the output index stays pinned at
            # tile 0, so the resident (not-yet-written) block is never flushed;
            # phase 1 starts at the same index (consecutive revisit) and then
            # walks the tiles, writing each output block exactly once.
            out_specs=pl.BlockSpec((pl.Squeezed(), K, tile_hw),
                                   lambda n, p, t: (n, 0, t * p)),
            scratch_shapes=[
                pltpu.VMEM((K, 1), jnp.float32),    # running sum (a rows)
                pltpu.VMEM((K, 1), jnp.float32),    # running max (a rows)
                pltpu.VMEM((Cm, 1), jnp.float32),   # running sum (mt rows)
                pltpu.VMEM((Cm, 1), jnp.float32),   # running max (mt rows)
                pltpu.VMEM((K, 1), jnp.float32),    # gate (x1 + x2) for a rows
                pltpu.VMEM((Cm, 1), jnp.float32),   # gate (x1 + x2) for mt rows
            ],
        ),
        compiler_params=pltpu.CompilerParams(
            # TODO(synk): on v7x with N==1 only one TensorCore is used; a
            # core-split of the HW-tile axis (partial pools per core + tiny
            # cross-core combine) would be needed to fill the second core.
            dimension_semantics=("parallel", "arbitrary", "arbitrary"),
            vmem_limit_bytes=vmem_limit),
    )(x, mt, *weight_args)
    return out.reshape(N, K, H, W)


# --------------------------------------------------------------------------- #
# Pure-JAX NCHW reference mirroring the PyTorch forward.
# --------------------------------------------------------------------------- #
def aaff_reference(x, mt, w_cov2, w_fc1, b_fc1, w_fc2, b_fc2):
    def conv1x1(inp, w, b=None):
        out = jnp.einsum('nchw,oc->nohw', inp, w)
        if b is not None:
            out = out + b[None, :, None, None]
        return out
    K, Cin = w_cov2.shape[:2]
    a = conv1x1(x, w_cov2.reshape(K, Cin))
    cat = jnp.concatenate([a, mt], axis=1)
    C = cat.shape[1]
    avg = jnp.mean(cat, axis=(2, 3), keepdims=True)
    mx = jnp.max(cat, axis=(2, 3), keepdims=True)

    def gate(v):
        h = jax.nn.relu(conv1x1(v, w_fc1.reshape(C, C), b_fc1))
        return jax.nn.sigmoid(conv1x1(h, w_fc2.reshape(C, C), b_fc2))

    x1, x2 = gate(avg), gate(mx)
    out = x1 * cat + x2 * cat
    return conv1x1(out, w_cov2.reshape(K, Cin))


if __name__ == "__main__":
    # input_channels=8, internal_neurons=4 -> mt has 4 channels (K + Cm == Cin).
    N, Cin, H, W = 2, 8, 16, 16
    K = 4
    Cm = Cin - K

    key = jax.random.PRNGKey(0)
    k = jax.random.split(key, 7)
    x = jax.random.normal(k[0], (N, Cin, H, W), jnp.float32)
    mt = jax.random.normal(k[1], (N, Cm, H, W), jnp.float32)

    # Parameter shapes follow nn.Conv2d in __init__ (fc1/fc2 bias=True,
    # cov2 bias=False, self.cov unused in forward()).
    w_fc1 = jax.random.normal(k[2], (Cin, Cin, 1, 1), jnp.float32) * 0.1
    b_fc1 = jax.random.normal(k[3], (Cin,), jnp.float32) * 0.1
    w_fc2 = jax.random.normal(k[4], (Cin, Cin, 1, 1), jnp.float32) * 0.1
    b_fc2 = jax.random.normal(k[5], (Cin,), jnp.float32) * 0.1
    w_cov2 = jax.random.normal(k[6], (K, Cin, 1, 1), jnp.float32) * 0.1

    ref = aaff_reference(x, mt, w_cov2, w_fc1, b_fc1, w_fc2, b_fc2)

    # 1) fp32, single-pass VMEM-resident path (preferred: one HBM read of x/mt).
    out = aaff_forward(x, mt, w_cov2, w_fc1, b_fc1, w_fc2, b_fc2)
    out = jax.block_until_ready(out)
    assert out.shape == (N, K, H, W)
    assert jnp.allclose(out, ref, atol=1e-4, rtol=1e-4), "fp32 single-pass mismatch"

    # 2) fp32, forced two-phase streaming fallback with nt > 1 and N > 1
    #    (regression test for the pinned-output-block pool phase).
    out_s = aaff_forward(x, mt, w_cov2, w_fc1, b_fc1, w_fc2, b_fc2,
                         tile_hw=128, force_streaming=True)
    out_s = jax.block_until_ready(out_s)
    assert jnp.allclose(out_s, ref, atol=1e-4, rtol=1e-4), "fp32 streaming mismatch"

    # 3) bf16 streaming/compute dtype on the HBM-facing tensors (v5e/v6e/v7x
    #    friendly); pools, gate MLP and matmul accumulation stay fp32.  Gates
    #    are derived from bf16-quantized pools, hence the looser tolerance.
    out_bf16 = aaff_forward(x, mt, w_cov2, w_fc1, b_fc1, w_fc2, b_fc2,
                            compute_dtype=jnp.bfloat16)
    out_bf16 = jax.block_until_ready(out_bf16)
    assert jnp.allclose(out_bf16.astype(jnp.float32), ref,
                        atol=5e-2, rtol=5e-2), "bf16 mismatch vs reference"

    print("KERNEL_OK")
</pallas_src>

<mosaic_0001>
module attributes {stable_mosaic.version = 11 : i64} {
  func.func @_aaff_single_kernel(%arg0: i32, %arg1: memref<1x8x256xf32, #tpu.memory_space<vmem>>, %arg2: memref<1x4x256xf32, #tpu.memory_space<vmem>>, %arg3: memref<4x8xf32, #tpu.memory_space<vmem>>, %arg4: memref<4x4xf32, #tpu.memory_space<vmem>>, %arg5: memref<4x4xf32, #tpu.memory_space<vmem>>, %arg6: memref<8x4xf32, #tpu.memory_space<vmem>>, %arg7: memref<8x4xf32, #tpu.memory_space<vmem>>, %arg8: memref<8x1xf32, #tpu.memory_space<vmem>>, %arg9: memref<4x8xf32, #tpu.memory_space<vmem>>, %arg10: memref<4x8xf32, #tpu.memory_space<vmem>>, %arg11: memref<4x1xf32, #tpu.memory_space<vmem>>, %arg12: memref<4x1xf32, #tpu.memory_space<vmem>>, %arg13: memref<1x4x256xf32, #tpu.memory_space<vmem>>, %arg14: memref<4x1xf32, #tpu.memory_space<vmem>>, %arg15: memref<4x1xf32, #tpu.memory_space<vmem>>, %arg16: memref<4x1xf32, #tpu.memory_space<vmem>>, %arg17: memref<4x1xf32, #tpu.memory_space<vmem>>) attributes {dimension_semantics = [#tpu.dimension_semantics<parallel>], iteration_bounds = array<i64: 2>, scalar_prefetch = 0 : i64, scratch_operands = 4 : i64, tpu.core_type = #tpu.core_type<tc>, window_params = [{transform_indices = @transform_0, window_bounds = array<i64: 1, 8, 256>}, {transform_indices = @transform_1, window_bounds = array<i64: 1, 4, 256>}, {pipeline_mode = #tpu.pipeline_mode<synchronous>, transform_indices = @transform_2, window_bounds = array<i64: 4, 8>}, {pipeline_mode = #tpu.pipeline_mode<synchronous>, transform_indices = @transform_3, window_bounds = array<i64: 4, 4>}, {pipeline_mode = #tpu.pipeline_mode<synchronous>, transform_indices = @transform_4, window_bounds = array<i64: 4, 4>}, {pipeline_mode = #tpu.pipeline_mode<synchronous>, transform_indices = @transform_5, window_bounds = array<i64: 8, 4>}, {pipeline_mode = #tpu.pipeline_mode<synchronous>, transform_indices = @transform_6, window_bounds = array<i64: 8, 4>}, {pipeline_mode = #tpu.pipeline_mode<synchronous>, transform_indices = @transform_7, window_bounds = array<i64: 8, 1>}, {pipeline_mode = #tpu.pipeline_mode<synchronous>, transform_indices = @transform_8, window_bounds = array<i64: 4, 8>}, {pipeline_mode = #tpu.pipeline_mode<synchronous>, transform_indices = @transform_9, window_bounds = array<i64: 4, 8>}, {pipeline_mode = #tpu.pipeline_mode<synchronous>, transform_indices = @transform_10, window_bounds = array<i64: 4, 1>}, {pipeline_mode = #tpu.pipeline_mode<synchronous>, transform_indices = @transform_11, window_bounds = array<i64: 4, 1>}, {transform_indices = @transform_12, window_bounds = array<i64: 1, 4, 256>}]} {
    %c0 = arith.constant 0 : index
    %c0_0 = arith.constant 0 : index
    %0 = vector.load %arg3[%c0, %c0_0] : memref<4x8xf32, #tpu.memory_space<vmem>>, vector<4x8xf32>
    %c0_1 = arith.constant 0 : index
    %c0_2 = arith.constant 0 : index
    %1 = vector.load %arg4[%c0_1, %c0_2] : memref<4x4xf32, #tpu.memory_space<vmem>>, vector<4x4xf32>
    %c0_3 = arith.constant 0 : index
    %c0_4 = arith.constant 0 : index
    %2 = vector.load %arg5[%c0_3, %c0_4] : memref<4x4xf32, #tpu.memory_space<vmem>>, vector<4x4xf32>
    %cst = arith.constant 0.000000e+00 : f32
    %3 = vector.broadcast %cst : f32 to vector<4x1xf32>
    %c0_5 = arith.constant 0 : index
    %c0_6 = arith.constant 0 : index
    %4 = vector.load %arg14[%c0_5, %c0_6] : memref<4x1xf32, #tpu.memory_space<vmem>>, vector<4x1xf32>
    tpu.vector_store %arg14[%c0_5, %c0_6], %3 {strides = array<i32>} : memref<4x1xf32, #tpu.memory_space<vmem>>, vector<4x1xf32>,
    %cst_7 = arith.constant 0.000000e+00 : f32
    %5 = vector.broadcast %cst_7 : f32 to vector<4x1xf32>
    %c0_8 = arith.constant 0 : index
    %c0_9 = arith.constant 0 : index
    %6 = vector.load %arg16[%c0_8, %c0_9] : memref<4x1xf32, #tpu.memory_space<vmem>>, vector<4x1xf32>
    tpu.vector_store %arg16[%c0_8, %c0_9], %5 {strides = array<i32>} : memref<4x1xf32, #tpu.memory_space<vmem>>, vector<4x1xf32>,
    %cst_10 = arith.constant 0xFF800000 : f32
    %7 = vector.broadcast %cst_10 : f32 to vector<4x1xf32>
    %c0_11 = arith.constant 0 : index
    %c0_12 = arith.constant 0 : index
    %8 = vector.load %arg15[%c0_11, %c0_12] : memref<4x1xf32, #tpu.memory_space<vmem>>, vector<4x1xf32>
    tpu.vector_store %arg15[%c0_11, %c0_12], %7 {strides = array<i32>} : memref<4x1xf32, #tpu.memory_space<vmem>>, vector<4x1xf32>,
    %cst_13 = arith.constant 0xFF800000 : f32
    %9 = vector.broadcast %cst_13 : f32 to vector<4x1xf32>
    %c0_14 = arith.constant 0 : index
    %c0_15 = arith.constant 0 : index
    %10 = vector.load %arg17[%c0_14, %c0_15] : memref<4x1xf32, #tpu.memory_space<vmem>>, vector<4x1xf32>
    tpu.vector_store %arg17[%c0_14, %c0_15], %9 {strides = array<i32>} : memref<4x1xf32, #tpu.memory_space<vmem>>, vector<4x1xf32>,
    %c0_i32 = arith.constant 0 : i32
    %c1_i32 = arith.constant 1 : i32
    %11 = arith.muli %c0_i32, %c1_i32 : i32
    %c0_i32_16 = arith.constant 0 : i32
    %12 = arith.addi %c0_i32_16, %11 : i32
    %c256_i32 = arith.constant 256 : i32
    %13 = arith.muli %12, %c256_i32 : i32
    %14 = tpu.assume_multiple %13, 256 : i32
    %c0_17 = arith.constant 0 : index
    %c0_18 = arith.constant 0 : index
    %15 = arith.index_cast %14 : i32 to index
    %16 = vector.load %arg1[%c0_17, %c0_18, %15] : memref<1x8x256xf32, #tpu.memory_space<vmem>>, vector<1x8x256xf32>
    %17 = vector.shape_cast %16 : vector<1x8x256xf32> to vector<8x256xf32>
    %cst_19 = arith.constant dense<0.000000e+00> : vector<4x256xf32>
    %18 = tpu.matmul %0, %17, %cst_19 {dimension_numbers = #tpu.dot_dimension_numbers<[1], [0], [0], [1], [0, 0, 1, 1], [], []>} : vector<4x8xf32>, vector<8x256xf32>, vector<4x256xf32> -> vector<4x256xf32>
    %c0_20 = arith.constant 0 : index
    %c0_21 = arith.constant 0 : index
    %19 = arith.index_cast %14 : i32 to index
    %20 = vector.load %arg2[%c0_20, %c0_21, %19] : memref<1x4x256xf32, #tpu.memory_space<vmem>>, vector<1x4x256xf32>
    %21 = vector.shape_cast %20 : vector<1x4x256xf32> to vector<4x256xf32>
    %c0_22 = arith.constant 0 : index
    %c0_23 = arith.constant 0 : index
    %22 = vector.load %arg14[%c0_22, %c0_23] : memref<4x1xf32, #tpu.memory_space<vmem>>, vector<4x1xf32>
    %cst_24 = arith.constant dense<0.000000e+00> : vector<4xf32>
    %23 = vector.multi_reduction <add>, %18, %cst_24 [1] : vector<4x256xf32> to vector<4xf32>
    %24 = vector.shape_cast %23 : vector<4xf32> to vector<4x1xf32>
    %25 = arith.addf %22, %24 : vector<4x1xf32>
    %c0_25 = arith.constant 0 : index
    %c0_26 = arith.constant 0 : index
    %26 = vector.load %arg14[%c0_25, %c0_26] : memref<4x1xf32, #tpu.memory_space<vmem>>, vector<4x1xf32>
    tpu.vector_store %arg14[%c0_25, %c0_26], %25 {strides = array<i32>} : memref<4x1xf32, #tpu.memory_space<vmem>>, vector<4x1xf32>,
    %c0_27 = arith.constant 0 : index
    %c0_28 = arith.constant 0 : index
    %27 = vector.load %arg15[%c0_27, %c0_28] : memref<4x1xf32, #tpu.memory_space<vmem>>, vector<4x1xf32>
    %cst_29 = arith.constant dense<0xFF800000> : vector<4xf32>
    %28 = vector.multi_reduction <maximumf>, %18, %cst_29 [1] : vector<4x256xf32> to vector<4xf32>
    %29 = vector.shape_cast %28 : vector<4xf32> to vector<4x1xf32>
    %30 = arith.maximumf %27, %29 : vector<4x1xf32>
    %c0_30 = arith.constant 0 : index
    %c0_31 = arith.constant 0 : index
    %31 = vector.load %arg15[%c0_30, %c0_31] : memref<4x1xf32, #tpu.memory_space<vmem>>, vector<4x1xf32>
    tpu.vector_store %arg15[%c0_30, %c0_31], %30 {strides = array<i32>} : memref<4x1xf32, #tpu.memory_space<vmem>>, vector<4x1xf32>,
    %c0_32 = arith.constant 0 : index
    %c0_33 = arith.constant 0 : index
    %32 = vector.load %arg16[%c0_32, %c0_33] : memref<4x1xf32, #tpu.memory_space<vmem>>, vector<4x1xf32>
    %cst_34 = arith.constant dense<0.000000e+00> : vector<4xf32>
    %33 = vector.multi_reduction <add>, %21, %cst_34 [1] : vector<4x256xf32> to vector<4xf32>
    %34 = vector.shape_cast %33 : vector<4xf32> to vector<4x1xf32>
    %35 = arith.addf %32, %34 : vector<4x1xf32>
    %c0_35 = arith.constant 0 : index
    %c0_36 = arith.constant 0 : index
    %36 = vector.load %arg16[%c0_35, %c0_36] : memref<4x1xf32, #tpu.memory_space<vmem>>, vector<4x1xf32>
    tpu.vector_store %arg16[%c0_35, %c0_36], %35 {strides = array<i32>} : memref<4x1xf32, #tpu.memory_space<vmem>>, vector<4x1xf32>,
    %c0_37 = arith.constant 0 : index
    %c0_38 = arith.constant 0 : index
    %37 = vector.load %arg17[%c0_37, %c0_38] : memref<4x1xf32, #tpu.memory_space<vmem>>, vector<4x1xf32>
    %cst_39 = arith.constant dense<0xFF800000> : vector<4xf32>
    %38 = vector.multi_reduction <maximumf>, %21, %cst_39 [1] : vector<4x256xf32> to vector<4xf32>
    %39 = vector.shape_cast %38 : vector<4xf32> to vector<4x1xf32>
    %40 = arith.maximumf %37, %39 : vector<4x1xf32>
    %c0_40 = arith.constant 0 : index
    %c0_41 = arith.constant 0 : index
    %41 = vector.load %arg17[%c0_40, %c0_41] : memref<4x1xf32, #tpu.memory_space<vmem>>, vector<4x1xf32>
    tpu.vector_store %arg17[%c0_40, %c0_41], %40 {strides = array<i32>} : memref<4x1xf32, #tpu.memory_space<vmem>>, vector<4x1xf32>,
    %c1_i32_42 = arith.constant 1 : i32
    %c0_43 = arith.constant 0 : index
    %c0_44 = arith.constant 0 : index
    %42 = vector.load %arg14[%c0_43, %c0_44] : memref<4x1xf32, #tpu.memory_space<vmem>>, vector<4x1xf32>
    %c0_45 = arith.constant 0 : index
    %c0_46 = arith.constant 0 : index
    %43 = vector.load %arg15[%c0_45, %c0_46] : memref<4x1xf32, #tpu.memory_space<vmem>>, vector<4x1xf32>
    %c0_47 = arith.constant 0 : index
    %c0_48 = arith.constant 0 : index
    %44 = vector.load %arg16[%c0_47, %c0_48] : memref<4x1xf32, #tpu.memory_space<vmem>>, vector<4x1xf32>
    %c0_49 = arith.constant 0 : index
    %c0_50 = arith.constant 0 : index
    %45 = vector.load %arg17[%c0_49, %c0_50] : memref<4x1xf32, #tpu.memory_space<vmem>>, vector<4x1xf32>
    %c0_51 = arith.constant 0 : index
    %c0_52 = arith.constant 0 : index
    %46 = vector.load %arg6[%c0_51, %c0_52] : memref<8x4xf32, #tpu.memory_space<vmem>>, vector<8x4xf32>
    %c0_53 = arith.constant 0 : index
    %c0_54 = arith.constant 0 : index
    %47 = vector.load %arg7[%c0_53, %c0_54] : memref<8x4xf32, #tpu.memory_space<vmem>>, vector<8x4xf32>
    %c0_55 = arith.constant 0 : index
    %c0_56 = arith.constant 0 : index
    %48 = vector.load %arg8[%c0_55, %c0_56] : memref<8x1xf32, #tpu.memory_space<vmem>>, vector<8x1xf32>
    %c0_57 = arith.constant 0 : index
    %c0_58 = arith.constant 0 : index
    %49 = vector.load %arg9[%c0_57, %c0_58] : memref<4x8xf32, #tpu.memory_space<vmem>>, vector<4x8xf32>
    %c0_59 = arith.constant 0 : index
    %c0_60 = arith.constant 0 : index
    %50 = vector.load %arg10[%c0_59, %c0_60] : memref<4x8xf32, #tpu.memory_space<vmem>>, vector<4x8xf32>
    %c0_61 = arith.constant 0 : index
    %c0_62 = arith.constant 0 : index
    %51 = vector.load %arg11[%c0_61, %c0_62] : memref<4x1xf32, #tpu.memory_space<vmem>>, vector<4x1xf32>
    %c0_63 = arith.constant 0 : index
    %c0_64 = arith.constant 0 : index
    %52 = vector.load %arg12[%c0_63, %c0_64] : memref<4x1xf32, #tpu.memory_space<vmem>>, vector<4x1xf32>
    %cst_65 = arith.constant 3.906250e-03 : f32
    %53 = vector.broadcast %cst_65 : f32 to vector<4x1xf32>
    %54 = arith.mulf %42, %53 : vector<4x1xf32>
    %55 = tpu.concatenate %54, %43 in 1 : vector<4x1xf32>, vector<4x1xf32> -> vector<4x2xf32>
    %cst_66 = arith.constant 3.906250e-03 : f32
    %56 = vector.broadcast %cst_66 : f32 to vector<4x1xf32>
    %57 = arith.mulf %44, %56 : vector<4x1xf32>
    %58 = tpu.concatenate %57, %45 in 1 : vector<4x1xf32>, vector<4x1xf32> -> vector<4x2xf32>
    %cst_67 = arith.constant dense<0.000000e+00> : vector<8x2xf32>
    %59 = tpu.matmul %46, %55, %cst_67 {dimension_numbers = #tpu.dot_dimension_numbers<[1], [0], [0], [1], [0, 0, 1, 1], [], []>} : vector<8x4xf32>, vector<4x2xf32>, vector<8x2xf32> -> vector<8x2xf32>
    %cst_68 = arith.constant dense<0.000000e+00> : vector<8x2xf32>
    %60 = tpu.matmul %47, %58, %cst_68 {dimension_numbers = #tpu.dot_dimension_numbers<[1], [0], [0], [1], [0, 0, 1, 1], [], []>} : vector<8x4xf32>, vector<4x2xf32>, vector<8x2xf32> -> vector<8x2xf32>
    %61 = arith.addf %59, %60 : vector<8x2xf32>
    %62 = vector.broadcast %48 : vector<8x1xf32> to vector<8x2xf32>
    %63 = arith.addf %61, %62 : vector<8x2xf32>
    %cst_69 = arith.constant 0.000000e+00 : f32
    %64 = vector.broadcast %cst_69 : f32 to vector<8x2xf32>
    %65 = arith.maximumf %63, %64 : vector<8x2xf32>
    %cst_70 = arith.constant dense<0.000000e+00> : vector<4x2xf32>
    %66 = tpu.matmul %49, %65, %cst_70 {dimension_numbers = #tpu.dot_dimension_numbers<[1], [0], [0], [1], [0, 0, 1, 1], [], []>} : vector<4x8xf32>, vector<8x2xf32>, vector<4x2xf32> -> vector<4x2xf32>
    %67 = vector.broadcast %51 : vector<4x1xf32> to vector<4x2xf32>
    %68 = arith.addf %66, %67 : vector<4x2xf32>
    %69 = arith.negf %68 : vector<4x2xf32>
    %70 = math.exp %69 : vector<4x2xf32>
    %cst_71 = arith.constant 1.000000e+00 : f32
    %71 = vector.broadcast %cst_71 : f32 to vector<4x2xf32>
    %72 = arith.addf %71, %70 : vector<4x2xf32>
    %73 = arith.divf %71, %72 : vector<4x2xf32>
    %cst_72 = arith.constant dense<0.000000e+00> : vector<4xf32>
    %74 = vector.multi_reduction <add>, %73, %cst_72 [1] : vector<4x2xf32> to vector<4xf32>
    %75 = vector.shape_cast %74 : vector<4xf32> to vector<4x1xf32>
    %cst_73 = arith.constant dense<0.000000e+00> : vector<4x2xf32>
    %76 = tpu.matmul %50, %65, %cst_73 {dimension_numbers = #tpu.dot_dimension_numbers<[1], [0], [0], [1], [0, 0, 1, 1], [], []>} : vector<4x8xf32>, vector<8x2xf32>, vector<4x2xf32> -> vector<4x2xf32>
    %77 = vector.broadcast %52 : vector<4x1xf32> to vector<4x2xf32>
    %78 = arith.addf %76, %77 : vector<4x2xf32>
    %79 = arith.negf %78 : vector<4x2xf32>
    %80 = math.exp %79 : vector<4x2xf32>
    %cst_74 = arith.constant 1.000000e+00 : f32
    %81 = vector.broadcast %cst_74 : f32 to vector<4x2xf32>
    %82 = arith.addf %81, %80 : vector<4x2xf32>
    %83 = arith.divf %81, %82 : vector<4x2xf32>
    %cst_75 = arith.constant dense<0.000000e+00> : vector<4xf32>
    %84 = vector.multi_reduction <add>, %83, %cst_75 [1] : vector<4x2xf32> to vector<4xf32>
    %85 = vector.shape_cast %84 : vector<4xf32> to vector<4x1xf32>
    %c0_i32_76 = arith.constant 0 : i32
    %c1_i32_77 = arith.constant 1 : i32
    %86 = arith.muli %c0_i32_76, %c1_i32_77 : i32
    %c0_i32_78 = arith.constant 0 : i32
    %87 = arith.addi %c0_i32_78, %86 : i32
    %c256_i32_79 = arith.constant 256 : i32
    %88 = arith.muli %87, %c256_i32_79 : i32
    %89 = tpu.assume_multiple %88, 256 : i32
    %c0_80 = arith.constant 0 : index
    %c0_81 = arith.constant 0 : index
    %90 = arith.index_cast %89 : i32 to index
    %91 = vector.load %arg1[%c0_80, %c0_81, %90] : memref<1x8x256xf32, #tpu.memory_space<vmem>>, vector<1x8x256xf32>
    %92 = vector.shape_cast %91 : vector<1x8x256xf32> to vector<8x256xf32>
    %cst_82 = arith.constant dense<0.000000e+00> : vector<4x256xf32>
    %93 = tpu.matmul %0, %92, %cst_82 {dimension_numbers = #tpu.dot_dimension_numbers<[1], [0], [0], [1], [0, 0, 1, 1], [], []>} : vector<4x8xf32>, vector<8x256xf32>, vector<4x256xf32> -> vector<4x256xf32>
    %94 = vector.broadcast %75 : vector<4x1xf32> to vector<4x256xf32>
    %95 = arith.mulf %93, %94 : vector<4x256xf32>
    %c0_83 = arith.constant 0 : index
    %c0_84 = arith.constant 0 : index
    %96 = arith.index_cast %89 : i32 to index
    %97 = vector.load %arg2[%c0_83, %c0_84, %96] : memref<1x4x256xf32, #tpu.memory_space<vmem>>, vector<1x4x256xf32>
    %98 = vector.shape_cast %97 : vector<1x4x256xf32> to vector<4x256xf32>
    %99 = vector.broadcast %85 : vector<4x1xf32> to vector<4x256xf32>
    %100 = arith.mulf %98, %99 : vector<4x256xf32>
    %cst_85 = arith.constant dense<0.000000e+00> : vector<4x256xf32>
    %101 = tpu.matmul %1, %95, %cst_85 {dimension_numbers = #tpu.dot_dimension_numbers<[1], [0], [0], [1], [0, 0, 1, 1], [], []>} : vector<4x4xf32>, vector<4x256xf32>, vector<4x256xf32> -> vector<4x256xf32>
    %cst_86 = arith.constant dense<0.000000e+00> : vector<4x256xf32>
    %102 = tpu.matmul %2, %100, %cst_86 {dimension_numbers = #tpu.dot_dimension_numbers<[1], [0], [0], [1], [0, 0, 1, 1], [], []>} : vector<4x4xf32>, vector<4x256xf32>, vector<4x256xf32> -> vector<4x256xf32>
    %103 = arith.addf %101, %102 : vector<4x256xf32>
    %c0_87 = arith.constant 0 : index
    %c0_88 = arith.constant 0 : index
    %104 = arith.index_cast %89 : i32 to index
    %105 = vector.load %arg13[%c0_87, %c0_88, %104] : memref<1x4x256xf32, #tpu.memory_space<vmem>>, vector<1x4x256xf32>
    %106 = vector.shape_cast %105 : vector<1x4x256xf32> to vector<4x256xf32>
    %107 = vector.shape_cast %103 : vector<4x256xf32> to vector<1x4x256xf32>
    tpu.vector_store %arg13[%c0_87, %c0_88, %104], %107 {strides = array<i32>} : memref<1x4x256xf32, #tpu.memory_space<vmem>>, vector<1x4x256xf32>,
    %c1_i32_89 = arith.constant 1 : i32
    return
  }
  func.func @transform_0(%arg0: i32) -> (i32, i32, i32) {
    %c0_i32 = arith.constant 0 : i32
    %c0_i32_0 = arith.constant 0 : i32
    %c0_i32_1 = arith.constant 0 : i32
    return %arg0, %c0_i32, %c0_i32_0 : i32, i32, i32
  }
  func.func @transform_1(%arg0: i32) -> (i32, i32, i32) {
    %c0_i32 = arith.constant 0 : i32
    %c0_i32_0 = arith.constant 0 : i32
    %c0_i32_1 = arith.constant 0 : i32
    return %arg0, %c0_i32, %c0_i32_0 : i32, i32, i32
  }
  func.func @transform_2(%arg0: i32) -> (i32, i32) {
    %c0_i32 = arith.constant 0 : i32
    %c0_i32_0 = arith.constant 0 : i32
    %c0_i32_1 = arith.constant 0 : i32
    return %c0_i32, %c0_i32_0 : i32, i32
  }
  func.func @transform_3(%arg0: i32) -> (i32, i32) {
    %c0_i32 = arith.constant 0 : i32
    %c0_i32_0 = arith.constant 0 : i32
    %c0_i32_1 = arith.constant 0 : i32
    return %c0_i32, %c0_i32_0 : i32, i32
  }
  func.func @transform_4(%arg0: i32) -> (i32, i32) {
    %c0_i32 = arith.constant 0 : i32
    %c0_i32_0 = arith.constant 0 : i32
    %c0_i32_1 = arith.constant 0 : i32
    return %c0_i32, %c0_i32_0 : i32, i32
  }
  func.func @transform_5(%arg0: i32) -> (i32, i32) {
    %c0_i32 = arith.constant 0 : i32
    %c0_i32_0 = arith.constant 0 : i32
    %c0_i32_1 = arith.constant 0 : i32
    return %c0_i32, %c0_i32_0 : i32, i32
  }
  func.func @transform_6(%arg0: i32) -> (i32, i32) {
    %c0_i32 = arith.constant 0 : i32
    %c0_i32_0 = arith.constant 0 : i32
    %c0_i32_1 = arith.constant 0 : i32
    return %c0_i32, %c0_i32_0 : i32, i32
  }
  func.func @transform_7(%arg0: i32) -> (i32, i32) {
    %c0_i32 = arith.constant 0 : i32
    %c0_i32_0 = arith.constant 0 : i32
    %c0_i32_1 = arith.constant 0 : i32
    return %c0_i32, %c0_i32_0 : i32, i32
  }
  func.func @transform_8(%arg0: i32) -> (i32, i32) {
    %c0_i32 = arith.constant 0 : i32
    %c0_i32_0 = arith.constant 0 : i32
    %c0_i32_1 = arith.constant 0 : i32
    return %c0_i32, %c0_i32_0 : i32, i32
  }
  func.func @transform_9(%arg0: i32) -> (i32, i32) {
    %c0_i32 = arith.constant 0 : i32
    %c0_i32_0 = arith.constant 0 : i32
    %c0_i32_1 = arith.constant 0 : i32
    return %c0_i32, %c0_i32_0 : i32, i32
  }
  func.func @transform_10(%arg0: i32) -> (i32, i32) {
    %c0_i32 = arith.constant 0 : i32
    %c0_i32_0 = arith.constant 0 : i32
    %c0_i32_1 = arith.constant 0 : i32
    return %c0_i32, %c0_i32_0 : i32, i32
  }
  func.func @transform_11(%arg0: i32) -> (i32, i32) {
    %c0_i32 = arith.constant 0 : i32
    %c0_i32_0 = arith.constant 0 : i32
    %c0_i32_1 = arith.constant 0 : i32
    return %c0_i32, %c0_i32_0 : i32, i32
  }
  func.func @transform_12(%arg0: i32) -> (i32, i32, i32) {
    %c0_i32 = arith.constant 0 : i32
    %c0_i32_0 = arith.constant 0 : i32
    %c0_i32_1 = arith.constant 0 : i32
    return %arg0, %c0_i32, %c0_i32_0 : i32, i32, i32
  }
}

</mosaic_0001>

<llo_original>
// kernel: tpu_custom_call.1
$region0: #{tpu_custom_call.1}
  #allocation0 [shape = 'u32[]', space=smem, size = 0x4, offset = 0x4, fixed_abs, tag = 'smem constant byte address 0x4 - core index']
  #allocation1 [shape = 'u32[144,128]{1,0:T(1,128)}', space=vmem, size = 0x12000, scoped, tag = 'internal scratch']
  #allocation2 [shape = 'f32[4,1]{1,0:T(4,128)}', space=vmem, size = 0x800, scoped, tag = 'scratch operand']
  #allocation3 [shape = 'f32[4,1]{1,0:T(4,128)}', space=vmem, size = 0x800, scoped, tag = 'scratch operand']
  #allocation4 [shape = 'f32[4,1]{1,0:T(4,128)}', space=vmem, size = 0x800, scoped, tag = 'scratch operand']
  #allocation5 [shape = 'f32[4,1]{1,0:T(4,128)}', space=vmem, size = 0x800, scoped, tag = 'scratch operand']
  %s0 = inlined_call_operand.vmem [shape: f32[2,8,256], index: 0, kind: input, shape index: {}]
  %s1 = inlined_call_operand.hbm [shape: f32[2,4,256], index: 1, kind: input, shape index: {}]
  %s2 = inlined_call_operand.vmem [shape: f32[4,8], index: 2, kind: input, shape index: {}]
  %s3 = inlined_call_operand.vmem [shape: f32[4,4], index: 3, kind: input, shape index: {}]
  %s4 = inlined_call_operand.hbm [shape: f32[4,4], index: 4, kind: input, shape index: {}]
  %s5 = inlined_call_operand.vmem [shape: f32[8,4], index: 5, kind: input, shape index: {}]
  %s6 = inlined_call_operand.vmem [shape: f32[8,4], index: 6, kind: input, shape index: {}]
  %s7 = inlined_call_operand.vmem [shape: f32[8,1], index: 7, kind: input, shape index: {}]
  %s8 = inlined_call_operand.vmem [shape: f32[4,8], index: 8, kind: input, shape index: {}]
  %s9 = inlined_call_operand.vmem [shape: f32[4,8], index: 9, kind: input, shape index: {}]
  %s10 = inlined_call_operand.vmem [shape: f32[4,1], index: 10, kind: input, shape index: {}]
  %s11 = inlined_call_operand.vmem [shape: f32[4,1], index: 11, kind: input, shape index: {}]
  %s12 = inlined_call_operand.hbm [shape: f32[2,4,256], index: 12, kind: output, shape index: {}]
  %s13 = sld [smem:[#allocation0]]
  $region89: #{tpu_custom_call.1} parent=0
    _
  %s15 = ssub.s32 1, %s13
  %s16 = scalar_select 0, %s15, %s13
  $region1: #{tpu_custom_call.1} parent=0
    #allocation6 [shape = 'u8[8192]{0}', space=vmem, size = 0x2000, scoped, tag = 'input window, operand 1']
    #allocation7 [shape = 's32[2]{0}', space=sflag, size = 0x8, scoped, tag = 'scoped memory for tpu_custom_call.1']
    #allocation8 [shape = 's32[2]{0}', space=sflag, size = 0x8, scoped, tag = 'scoped memory for tpu_custom_call.1']
    #allocation9 [shape = 'u8[2048]{0}', space=vmem, size = 0x800, scoped, tag = 'input window, operand 4, single buffered']
    #allocation10 [shape = 's32[1]{0}', space=sflag, size = 0x4, scoped, tag = 'scoped memory for tpu_custom_call.1']
    #allocation11 [shape = 'u8[8192]{0}', space=vmem, size = 0x2000, scoped, tag = 'output window, operand 0']
    %17 = vsyncpa [#allocation7], 0
    %s18 = scalar_lea.sflag [#allocation7], 1
    %19 = vsyncpa %s18, 0
    %20 = vsyncpa [#allocation10], 0
    %21 = vsyncpa [#allocation8], 0
    %s22 = scalar_lea.sflag [#allocation8], 1
    %23 = vsyncpa %s22, 0
    loop: start=0, step=1, limit=4
    $region2: #{tpu_custom_call.1} parent=1 // loop_pre_header
      _
    $region3: #{tpu_custom_call.1} parent=1 // loop_header
      %s25 = sphi 0, %s29
      %p26 = scmp.ge.s32.totalorder %s25, 4
      %s35 = sphi 0, %s37
      %s38 = sphi 0, %s35
      %s39 = sphi 0, %s38
      %s55 = sphi 0, %s39
      %s61 = sphi 0, %s63
      %s64 = sphi 0, %s61
      %s65 = sphi 0, %s64
      %s81 = sphi 0, %s65
      %s85 = sphi 0, %s85
      %s87 = sphi 0, %s85
      %s88 = sphi 0, %s87
      %s102 = sphi 0, %s88
      %s106 = sphi 0, %s106
      %s108 = sphi 0, %s106
      %s109 = sphi 0, %s108
      %s123 = sphi 0, %s109
      %s127 = sphi 0, %s127
      %s129 = sphi 0, %s127
      %s130 = sphi 0, %s129
      %s144 = sphi 0, %s130
      %s148 = sphi 0, %s148
      %s150 = sphi 0, %s148
      %s151 = sphi 0, %s150
      %s165 = sphi 0, %s151
      %s169 = sphi 0, %s169
      %s171 = sphi 0, %s169
      %s172 = sphi 0, %s171
      %s186 = sphi 0, %s172
      %s190 = sphi 0, %s190
      %s192 = sphi 0, %s190
      %s193 = sphi 0, %s192
      %s207 = sphi 0, %s193
      %s211 = sphi 0, %s211
      %s213 = sphi 0, %s211
      %s214 = sphi 0, %s213
      %s228 = sphi 0, %s214
      %s232 = sphi 0, %s232
      %s234 = sphi 0, %s232
      %s235 = sphi 0, %s234
      %s249 = sphi 0, %s235
      %s253 = sphi 0, %s253
      %s255 = sphi 0, %s253
      %s256 = sphi 0, %s255
      %s270 = sphi 0, %s256
      %s274 = sphi 0, %s274
      %s276 = sphi 0, %s274
      %s277 = sphi 0, %s276
      %s291 = sphi 0, %s277
      %s297 = sphi 0, %s299
      %s300 = sphi 0, %s297
      %s301 = sphi 0, %s300
      %s317 = sphi 0, %s301
    $region4: #{tpu_custom_call.1} parent=1 // loop_header_branch
      %28 = sbr.rel (%p26) target = $region8
    $region5: #{tpu_custom_call.1} parent=1 // loop_body
      %s30 = ssub.s32 %s25, 1
      %s31 = ssub.s32 %s25, 2
      %s32 = sadd.s32 %s25, 1
      %s33 = ssub.s32 %s25, %s32
      %p34 = scmp.eq.s32.totalorder %s33, 0
      %s36 = sadd.s32 %s35, 1
      %s37 = scalar_select %p34, %s35, %s36
      %p40 = pneg %p34
      %p41 = scmp.eq.s32.totalorder %s25, 1
      %p42 = por %p40, %p41
      %p43 = scmp.ne.s32.totalorder %s35, %s38
      %p44 = scmp.eq.s32.totalorder %s25, 0
      %p45 = por %p43, %p44
      %p46 = scmp.ne.s32.totalorder %s35, %s38
      %p47 = scmp.eq.s32.totalorder %s30, 1
      %p48 = por %p46, %p47
      %p49 = scmp.ne.s32.totalorder %s38, %s39
      %p50 = scmp.eq.s32.totalorder %s30, 0
      %p51 = por %p49, %p50
      %p52 = scmp.ne.s32.totalorder %s38, %s39
      %p53 = scmp.eq.s32.totalorder %s31, 1
      %p54 = por %p52, %p53
      %p56 = scmp.ne.s32.totalorder %s39, %s55
      %p57 = scmp.eq.s32.totalorder %s31, 0
      %p58 = por %p56, %p57
      %s59 = ssub.s32 %s25, %s32
      %p60 = scmp.eq.s32.totalorder %s59, 0
      %s62 = sadd.s32 %s61, 1
      %s63 = scalar_select %p60, %s61, %s62
      %p66 = pneg %p60
      %p67 = scmp.eq.s32.totalorder %s25, 1
      %p68 = por %p66, %p67
      %p69 = scmp.ne.s32.totalorder %s61, %s64
      %p70 = scmp.eq.s32.totalorder %s25, 0
      %p71 = por %p69, %p70
      %p72 = scmp.ne.s32.totalorder %s61, %s64
      %p73 = scmp.eq.s32.totalorder %s30, 1
      %p74 = por %p72, %p73
      %p75 = scmp.ne.s32.totalorder %s64, %s65
      %p76 = scmp.eq.s32.totalorder %s30, 0
      %p77 = por %p75, %p76
      %p78 = scmp.ne.s32.totalorder %s64, %s65
      %p79 = scmp.eq.s32.totalorder %s31, 1
      %p80 = por %p78, %p79
      %p82 = scmp.ne.s32.totalorder %s65, %s81
      %p83 = scmp.eq.s32.totalorder %s31, 0
      %p84 = por %p82, %p83
      %s86 = sadd.s32 %s85, 1
      %p89 = scmp.eq.s32.totalorder %s25, 1
      %p90 = scmp.ne.s32.totalorder %s85, %s87
      %p91 = scmp.eq.s32.totalorder %s25, 0
      %p92 = por %p90, %p91
      %p93 = scmp.ne.s32.totalorder %s85, %s87
      %p94 = scmp.eq.s32.totalorder %s30, 1
      %p95 = por %p93, %p94
      %p96 = scmp.ne.s32.totalorder %s87, %s88
      %p97 = scmp.eq.s32.totalorder %s30, 0
      %p98 = por %p96, %p97
      %p99 = scmp.ne.s32.totalorder %s87, %s88
      %p100 = scmp.eq.s32.totalorder %s31, 1
      %p101 = por %p99, %p100
      %p103 = scmp.ne.s32.totalorder %s88, %s102
      %p104 = scmp.eq.s32.totalorder %s31, 0
      %p105 = por %p103, %p104
      %s107 = sadd.s32 %s106, 1
      %p110 = scmp.eq.s32.totalorder %s25, 1
      %p111 = scmp.ne.s32.totalorder %s106, %s108
      %p112 = scmp.eq.s32.totalorder %s25, 0
      %p113 = por %p111, %p112
      %p114 = scmp.ne.s32.totalorder %s106, %s108
      %p115 = scmp.eq.s32.totalorder %s30, 1
      %p116 = por %p114, %p115
      %p117 = scmp.ne.s32.totalorder %s108, %s109
      %p118 = scmp.eq.s32.totalorder %s30, 0
      %p119 = por %p117, %p118
      %p120 = scmp.ne.s32.totalorder %s108, %s109
      %p121 = scmp.eq.s32.totalorder %s31, 1
      %p122 = por %p120, %p121
      %p124 = scmp.ne.s32.totalorder %s109, %s123
      %p125 = scmp.eq.s32.totalorder %s31, 0
      %p126 = por %p124, %p125
      %s128 = sadd.s32 %s127, 1
      %p131 = scmp.eq.s32.totalorder %s25, 1
      %p132 = scmp.ne.s32.totalorder %s127, %s129
      %p133 = scmp.eq.s32.totalorder %s25, 0
      %p134 = por %p132, %p133
      %p135 = scmp.ne.s32.totalorder %s127, %s129
      %p136 = scmp.eq.s32.totalorder %s30, 1
      %p137 = por %p135, %p136
      %p138 = scmp.ne.s32.totalorder %s129, %s130
      %p139 = scmp.eq.s32.totalorder %s30, 0
      %p140 = por %p138, %p139
      %p141 = scmp.ne.s32.totalorder %s129, %s130
      %p142 = scmp.eq.s32.totalorder %s31, 1
      %p143 = por %p141, %p142
      %p145 = scmp.ne.s32.totalorder %s130, %s144
      %p146 = scmp.eq.s32.totalorder %s31, 0
      %p147 = por %p145, %p146
      %s149 = sadd.s32 %s148, 1
      %p152 = scmp.eq.s32.totalorder %s25, 1
      %p153 = scmp.ne.s32.totalorder %s148, %s150
      %p154 = scmp.eq.s32.totalorder %s25, 0
      %p155 = por %p153, %p154
      %p156 = scmp.ne.s32.totalorder %s148, %s150
      %p157 = scmp.eq.s32.totalorder %s30, 1
      %p158 = por %p156, %p157
      %p159 = scmp.ne.s32.totalorder %s150, %s151
      %p160 = scmp.eq.s32.totalorder %s30, 0
      %p161 = por %p159, %p160
      %p162 = scmp.ne.s32.totalorder %s150, %s151
      %p163 = scmp.eq.s32.totalorder %s31, 1
      %p164 = por %p162, %p163
      %p166 = scmp.ne.s32.totalorder %s151, %s165
      %p167 = scmp.eq.s32.totalorder %s31, 0
      %p168 = por %p166, %p167
      %s170 = sadd.s32 %s169, 1
      %p173 = scmp.eq.s32.totalorder %s25, 1
      %p174 = scmp.ne.s32.totalorder %s169, %s171
      %p175 = scmp.eq.s32.totalorder %s25, 0
      %p176 = por %p174, %p175
      %p177 = scmp.ne.s32.totalorder %s169, %s171
      %p178 = scmp.eq.s32.totalorder %s30, 1
      %p179 = por %p177, %p178
      %p180 = scmp.ne.s32.totalorder %s171, %s172
      %p181 = scmp.eq.s32.totalorder %s30, 0
      %p182 = por %p180, %p181
      %p183 = scmp.ne.s32.totalorder %s171, %s172
      %p184 = scmp.eq.s32.totalorder %s31, 1
      %p185 = por %p183, %p184
      %p187 = scmp.ne.s32.totalorder %s172, %s186
      %p188 = scmp.eq.s32.totalorder %s31, 0
      %p189 = por %p187, %p188
      %s191 = sadd.s32 %s190, 1
      %p194 = scmp.eq.s32.totalorder %s25, 1
      %p195 = scmp.ne.s32.totalorder %s190, %s192
      %p196 = scmp.eq.s32.totalorder %s25, 0
      %p197 = por %p195, %p196
      %p198 = scmp.ne.s32.totalorder %s190, %s192
      %p199 = scmp.eq.s32.totalorder %s30, 1
      %p200 = por %p198, %p199
      %p201 = scmp.ne.s32.totalorder %s192, %s193
      %p202 = scmp.eq.s32.totalorder %s30, 0
      %p203 = por %p201, %p202
      %p204 = scmp.ne.s32.totalorder %s192, %s193
      %p205 = scmp.eq.s32.totalorder %s31, 1
      %p206 = por %p204, %p205
      %p208 = scmp.ne.s32.totalorder %s193, %s207
      %p209 = scmp.eq.s32.totalorder %s31, 0
      %p210 = por %p208, %p209
      %s212 = sadd.s32 %s211, 1
      %p215 = scmp.eq.s32.totalorder %s25, 1
      %p216 = scmp.ne.s32.totalorder %s211, %s213
      %p217 = scmp.eq.s32.totalorder %s25, 0
      %p218 = por %p216, %p217
      %p219 = scmp.ne.s32.totalorder %s211, %s213
      %p220 = scmp.eq.s32.totalorder %s30, 1
      %p221 = por %p219, %p220
      %p222 = scmp.ne.s32.totalorder %s213, %s214
      %p223 = scmp.eq.s32.totalorder %s30, 0
      %p224 = por %p222, %p223
      %p225 = scmp.ne.s32.totalorder %s213, %s214
      %p226 = scmp.eq.s32.totalorder %s31, 1
      %p227 = por %p225, %p226
      %p229 = scmp.ne.s32.totalorder %s214, %s228
      %p230 = scmp.eq.s32.totalorder %s31, 0
      %p231 = por %p229, %p230
      %s233 = sadd.s32 %s232, 1
      %p236 = scmp.eq.s32.totalorder %s25, 1
      %p237 = scmp.ne.s32.totalorder %s232, %s234
      %p238 = scmp.eq.s32.totalorder %s25, 0
      %p239 = por %p237, %p238
      %p240 = scmp.ne.s32.totalorder %s232, %s234
      %p241 = scmp.eq.s32.totalorder %s30, 1
      %p242 = por %p240, %p241
      %p243 = scmp.ne.s32.totalorder %s234, %s235
      %p244 = scmp.eq.s32.totalorder %s30, 0
      %p245 = por %p243, %p244
      %p246 = scmp.ne.s32.totalorder %s234, %s235
      %p247 = scmp.eq.s32.totalorder %s31, 1
      %p248 = por %p246, %p247
      %p250 = scmp.ne.s32.totalorder %s235, %s249
      %p251 = scmp.eq.s32.totalorder %s31, 0
      %p252 = por %p250, %p251
      %s254 = sadd.s32 %s253, 1
      %p257 = scmp.eq.s32.totalorder %s25, 1
      %p258 = scmp.ne.s32.totalorder %s253, %s255
      %p259 = scmp.eq.s32.totalorder %s25, 0
      %p260 = por %p258, %p259
      %p261 = scmp.ne.s32.totalorder %s253, %s255
      %p262 = scmp.eq.s32.totalorder %s30, 1
      %p263 = por %p261, %p262
      %p264 = scmp.ne.s32.totalorder %s255, %s256
      %p265 = scmp.eq.s32.totalorder %s30, 0
      %p266 = por %p264, %p265
      %p267 = scmp.ne.s32.totalorder %s255, %s256
      %p268 = scmp.eq.s32.totalorder %s31, 1
      %p269 = por %p267, %p268
      %p271 = scmp.ne.s32.totalorder %s256, %s270
      %p272 = scmp.eq.s32.totalorder %s31, 0
      %p273 = por %p271, %p272
      %s275 = sadd.s32 %s274, 1
      %p278 = scmp.eq.s32.totalorder %s25, 1
      %p279 = scmp.ne.s32.totalorder %s274, %s276
      %p280 = scmp.eq.s32.totalorder %s25, 0
      %p281 = por %p279, %p280
      %p282 = scmp.ne.s32.totalorder %s274, %s276
      %p283 = scmp.eq.s32.totalorder %s30, 1
      %p284 = por %p282, %p283
      %p285 = scmp.ne.s32.totalorder %s276, %s277
      %p286 = scmp.eq.s32.totalorder %s30, 0
      %p287 = por %p285, %p286
      %p288 = scmp.ne.s32.totalorder %s276, %s277
      %p289 = scmp.eq.s32.totalorder %s31, 1
      %p290 = por %p288, %p289
      %p292 = scmp.ne.s32.totalorder %s277, %s291
      %p293 = scmp.eq.s32.totalorder %s31, 0
      %p294 = por %p292, %p293
      %s295 = ssub.s32 %s25, %s32
      %p296 = scmp.eq.s32.totalorder %s295, 0
      %s298 = sadd.s32 %s297, 1
      %s299 = scalar_select %p296, %s297, %s298
      %p302 = pneg %p296
      %p303 = scmp.eq.s32.totalorder %s25, 1
      %p304 = por %p302, %p303
      %p305 = scmp.ne.s32.totalorder %s297, %s300
      %p306 = scmp.eq.s32.totalorder %s25, 0
      %p307 = por %p305, %p306
      %p308 = scmp.ne.s32.totalorder %s297, %s300
      %p309 = scmp.eq.s32.totalorder %s30, 1
      %p310 = por %p308, %p309
      %p311 = scmp.ne.s32.totalorder %s300, %s301
      %p312 = scmp.eq.s32.totalorder %s30, 0
      %p313 = por %p311, %p312
      %p314 = scmp.ne.s32.totalorder %s300, %s301
      %p315 = scmp.eq.s32.totalorder %s31, 1
      %p316 = por %p314, %p315
      %p318 = scmp.ne.s32.totalorder %s301, %s317
      %p319 = scmp.eq.s32.totalorder %s31, 0
      %p320 = por %p318, %p319
      %p321 = scmp.le.s32.totalorder 1, %s25
      %p322 = scmp.lt.s32.totalorder %s25, 3
      %p323 = pnand %p321, %p322
      %p324 = pneg %p323
      // Predicated region
      $region9: #{tpu_custom_call.1} parent=5 // pred_check
        _
      $region10: #{tpu_custom_call.1} parent=5 // pred_check_branch
        %326 = sbr.rel (%p323) target = $region12
      $region11: #{tpu_custom_call.1} parent=5 // pred_region
        %s327 = ssub.s32 %s25, 1
        // Predicated region
        $region13: #{tpu_custom_call.1} parent=11 // pred_check
          %p328 = pneg %p98
        $region14: #{tpu_custom_call.1} parent=11 // pred_check_branch
          %330 = sbr.rel (%p328) target = $region16
        $region15: #{tpu_custom_call.1} parent=11 // pred_region
          _
        $region16: #{tpu_custom_call.1} parent=11 // pred_fallthru
          _
        // Predicated region
        $region17: #{tpu_custom_call.1} parent=11 // pred_check
          %p331 = pneg %p119
        $region18: #{tpu_custom_call.1} parent=11 // pred_check_branch
          %333 = sbr.rel (%p331) target = $region20
        $region19: #{tpu_custom_call.1} parent=11 // pred_region
          _
        $region20: #{tpu_custom_call.1} parent=11 // pred_fallthru
          _
        // Predicated region
        $region21: #{tpu_custom_call.1} parent=11 // pred_check
          %p334 = pneg %p140
        $region22: #{tpu_custom_call.1} parent=11 // pred_check_branch
          %336 = sbr.rel (%p334) target = $region24
        $region23: #{tpu_custom_call.1} parent=11 // pred_region
          %s338 = ssub.s32 64, 64
          %339 = vsyncadd [#allocation10], %s338
          %s341 = sshll.u32 [#allocation9], 4
          %s342 = int_to_ptr.vmem [resolvable:$true] %s341
          %344 = dma.hbm_to_vmem [thread:$0]  %s4, 64, %s342, [#allocation10]
        $region24: #{tpu_custom_call.1} parent=11 // pred_fallthru
          _
        // Predicated region
        $region25: #{tpu_custom_call.1} parent=11 // pred_check
          %p345 = pneg %p161
        $region26: #{tpu_custom_call.1} parent=11 // pred_check_branch
          %347 = sbr.rel (%p345) target = $region28
        $region27: #{tpu_custom_call.1} parent=11 // pred_region
          _
        $region28: #{tpu_custom_call.1} parent=11 // pred_fallthru
          _
        // Predicated region
        $region29: #{tpu_custom_call.1} parent=11 // pred_check
          %p348 = pneg %p182
        $region30: #{tpu_custom_call.1} parent=11 // pred_check_branch
          %350 = sbr.rel (%p348) target = $region32
        $region31: #{tpu_custom_call.1} parent=11 // pred_region
          _
        $region32: #{tpu_custom_call.1} parent=11 // pred_fallthru
          _
        // Predicated region
        $region33: #{tpu_custom_call.1} parent=11 // pred_check
          %p351 = pneg %p203
        $region34: #{tpu_custom_call.1} parent=11 // pred_check_branch
          %353 = sbr.rel (%p351) target = $region36
        $region35: #{tpu_custom_call.1} parent=11 // pred_region
          _
        $region36: #{tpu_custom_call.1} parent=11 // pred_fallthru
          _
        // Predicated region
        $region37: #{tpu_custom_call.1} parent=11 // pred_check
          %p354 = pneg %p224
        $region38: #{tpu_custom_call.1} parent=11 // pred_check_branch
          %356 = sbr.rel (%p354) target = $region40
        $region39: #{tpu_custom_call.1} parent=11 // pred_region
          _
        $region40: #{tpu_custom_call.1} parent=11 // pred_fallthru
          _
        // Predicated region
        $region41: #{tpu_custom_call.1} parent=11 // pred_check
          %p357 = pneg %p245
        $region42: #{tpu_custom_call.1} parent=11 // pred_check_branch
          %359 = sbr.rel (%p357) target = $region44
        $region43: #{tpu_custom_call.1} parent=11 // pred_region
          _
        $region44: #{tpu_custom_call.1} parent=11 // pred_fallthru
          _
        // Predicated region
        $region45: #{tpu_custom_call.1} parent=11 // pred_check
          %p360 = pneg %p266
        $region46: #{tpu_custom_call.1} parent=11 // pred_check_branch
          %362 = sbr.rel (%p360) target = $region48
        $region47: #{tpu_custom_call.1} parent=11 // pred_region
          _
        $region48: #{tpu_custom_call.1} parent=11 // pred_fallthru
          _
        // Predicated region
        $region49: #{tpu_custom_call.1} parent=11 // pred_check
          %p363 = pneg %p287
        $region50: #{tpu_custom_call.1} parent=11 // pred_check_branch
          %365 = sbr.rel (%p363) target = $region52
        $region51: #{tpu_custom_call.1} parent=11 // pred_region
          _
        $region52: #{tpu_custom_call.1} parent=11 // pred_fallthru
          _
      $region12: #{tpu_custom_call.1} parent=5 // pred_fallthru
        _
      %p366 = scmp.lt.s32.totalorder %s25, 2
      // Predicated region
      $region53: #{tpu_custom_call.1} parent=5 // pred_check
        %p367 = pneg %p366
      $region54: #{tpu_custom_call.1} parent=5 // pred_check_branch
        %369 = sbr.rel (%p367) target = $region56
      $region55: #{tpu_custom_call.1} parent=5 // pred_region
        // Predicated region
        $region57: #{tpu_custom_call.1} parent=55 // pred_check
          %p370 = pneg %p45
        $region58: #{tpu_custom_call.1} parent=55 // pred_check_branch
          %372 = sbr.rel (%p370) target = $region60
        $region59: #{tpu_custom_call.1} parent=55 // pred_region
          %p373 = scmp.lt.s32.totalorder %s25, 1
          %s374 = scalar_select %p373, %s25, 1
          %s375 = smul.addr %s374, 2
          %s376 = smul.addr %s375, 8
          %s377 = scalar_lea.vmem %s0, %s376
        $region60: #{tpu_custom_call.1} parent=55 // pred_fallthru
          _
        // Predicated region
        $region61: #{tpu_custom_call.1} parent=55 // pred_check
          %p378 = pneg %p71
        $region62: #{tpu_custom_call.1} parent=55 // pred_check_branch
          %380 = sbr.rel (%p378) target = $region64
        $region63: #{tpu_custom_call.1} parent=55 // pred_region
          %s381 = sand.u32 %s61, 1
          %s382 = scalar_lea.sflag [#allocation7], %s381
          %s383 = sand.u32 %s61, 1
          %s384 = smul.addr %s383, 8
          %s385 = scalar_lea.vmem [#allocation6], %s384
          %s387 = ssub.s32 128, 128
          %388 = vsyncadd %s382, %s387
          %s389 = smul.addr %s25, 2
          %s390 = smul.addr %s389, 64
          %s391 = scalar_lea.hbm %s1, %s390
          %s393 = sshll.u32 %s385, 4
          %s394 = int_to_ptr.vmem [resolvable:$true] %s393
          %396 = dma.hbm_to_vmem [thread:$0]  %s391, 128, %s394, %s382
        $region64: #{tpu_custom_call.1} parent=55 // pred_fallthru
          _
      $region56: #{tpu_custom_call.1} parent=5 // pred_fallthru
        _
      %p397 = scmp.le.s32.totalorder 1, %s25
      %p398 = scmp.lt.s32.totalorder %s25, 3
      %p399 = pnand %p397, %p398
      %p400 = pneg %p399
      // Predicated region
      $region65: #{tpu_custom_call.1} parent=5 // pred_check
        _
      $region66: #{tpu_custom_call.1} parent=5 // pred_check_branch
        %402 = sbr.rel (%p399) target = $region68
      $region67: #{tpu_custom_call.1} parent=5 // pred_region
        %s403 = ssub.s32 %s25, 1
        %s404 = sand.u32 %s64, 1
        %s405 = scalar_lea.sflag [#allocation7], %s404
        %s406 = sand.u32 %s64, 1
        %s407 = smul.addr %s406, 8
        %s408 = scalar_lea.vmem [#allocation6], %s407
        // Predicated region
        $region69: #{tpu_custom_call.1} parent=67 // pred_check
          %p409 = pneg %p77
        $region70: #{tpu_custom_call.1} parent=67 // pred_check_branch
          %411 = sbr.rel (%p409) target = $region72
        $region71: #{tpu_custom_call.1} parent=67 // pred_region
          %412 = dma.done %s405, 128
        $region72: #{tpu_custom_call.1} parent=67 // pred_fallthru
          _
        // Predicated region
        $region73: #{tpu_custom_call.1} parent=67 // pred_check
          %p413 = pneg %p140
        $region74: #{tpu_custom_call.1} parent=67 // pred_check_branch
          %415 = sbr.rel (%p413) target = $region76
        $region75: #{tpu_custom_call.1} parent=67 // pred_region
          %416 = dma.done [#allocation10], 64
        $region76: #{tpu_custom_call.1} parent=67 // pred_fallthru
          _
        %p417 = scmp.lt.s32.totalorder %s30, 1
        %s418 = scalar_select %p417, %s30, 1
        %s419 = smul.addr %s418, 2
        %s420 = smul.addr %s419, 8
        %s421 = scalar_lea.vmem %s0, %s420
        %p422 = pneg %p51
        %p423 = pneg %p48
        %s424 = sand.u32 %s64, 1
        %s425 = scalar_lea.sflag [#allocation7], %s424
        %s426 = sand.u32 %s64, 1
        %s427 = smul.addr %s426, 8
        %s428 = scalar_lea.vmem [#allocation6], %s427
        %p429 = pneg %p77
        %p430 = pneg %p74
        %p431 = pneg %p98
        %p432 = pneg %p95
        %p433 = pneg %p119
        %p434 = pneg %p116
        %p435 = pneg %p140
        %p436 = pneg %p137
        %p437 = pneg %p161
        %p438 = pneg %p158
        %p439 = pneg %p182
        %p440 = pneg %p179
        %p441 = pneg %p203
        %p442 = pneg %p200
        %p443 = pneg %p224
        %p444 = pneg %p221
        %p445 = pneg %p245
        %p446 = pneg %p242
        %p447 = pneg %p266
        %p448 = pneg %p263
        %p449 = pneg %p287
        %p450 = pneg %p284
        %p451 = pneg %p313
        %p452 = pneg %p310
        %s453 = sand.u32 %s300, 1
        %s454 = scalar_lea.sflag [#allocation8], %s453
        %s455 = sand.u32 %s300, 1
        %s456 = smul.addr %s455, 8
        %s457 = scalar_lea.vmem [#allocation11], %s456
        %p458 = scmp.lt.s32.totalorder %s30, 1
        %s459 = scalar_select %p458, %s30, 1
        %s460 = smul.addr %s459, 2
        %s461 = smul.addr %s460, 8
        %s462 = scalar_lea.vmem %s0, %s461
        %v463 = vld [vmem:[%s2] sm:$0xf]
        %v464 = vld [vmem:[%s3] sm:$0xf]
        %v465 = vld [vmem:[#allocation9] sm:$0xf]
        %vm466 = vcmask 3072
        %467 = vst.msk [vmem:[#allocation2] sm:$0xf] %vm466, 0.0
        %468 = vst.msk [vmem:[#allocation4] sm:$0xf] %vm466, 0.0
        %469 = vst.msk [vmem:[#allocation3] sm:$0xf] %vm466, -inf
        %470 = vst.msk [vmem:[#allocation5] sm:$0xf] %vm466, -inf
        %v471 = vld [vmem:[%s462] sm:$0xff]
        %v472 = vld [vmem:[%s462 + $0x8] sm:$0xff]
        %vm473 = vcmask 64512
        %v475 = vsel %vm473, %v463, 0
        %477 = vmatprep.subr.mxu0 0.0
        %478 = vmatpush1.msra.mxu0 0.0
        %479 = vmatprep.subr.mxu0 0.0
        %480 = vmatpush1.msra.mxu0 0.0
        %481 = vmatprep.subr.mxu0 0.0
        %482 = vmatpush1.msra.mxu0 0.0
        %483 = vmatprep.subr.mxu0 0.0
        %484 = vmatpush1.msra.mxu0 0.0
        %485 = vmatprep.subr.mxu0 0.0
        %486 = vmatpush1.msra.mxu0 0.0
        %487 = vmatprep.subr.mxu0 0.0
        %488 = vmatpush1.msra.mxu0 0.0
        %489 = vmatprep.subr.mxu0 0.0
        %490 = vmatpush1.msra.mxu0 0.0
        %491 = vmatprep.subr.mxu0 0.0
        %492 = vmatpush1.msra.mxu0 0.0
        %493 = vmatprep.subr.mxu0 0.0
        %494 = vmatpush1.msra.mxu0 0.0
        %495 = vmatprep.subr.mxu0 0.0
        %496 = vmatpush1.msra.mxu0 0.0
        %497 = vmatprep.subr.mxu0 0.0
        %498 = vmatpush1.msra.mxu0 0.0
        %499 = vmatprep.subr.mxu0 0.0
        %500 = vmatpush1.msra.mxu0 0.0
        %501 = vmatprep.subr.mxu0 0.0
        %502 = vmatpush1.msra.mxu0 0.0
        %503 = vmatprep.subr.mxu0 0.0
        %504 = vmatpush1.msra.mxu0 0.0
        %505 = vmatprep.subr.mxu0 0.0
        %506 = vmatpush1.msra.mxu0 0.0
        %507 = vmatprep.subr.mxu0 %v472
        %508 = vmatpush1.msra.mxu0 %v471
        %509 = vmatprep.subr.mxu0 0.0
        %510 = vmatpush2.msra.mxu0 0.0
        %511 = vmatprep.subr.mxu0 0.0
        %512 = vmatpush2.msra.mxu0 0.0
        %513 = vmatprep.subr.mxu0 0.0
        %514 = vmatpush2.msra.mxu0 0.0
        %515 = vmatprep.subr.mxu0 0.0
        %516 = vmatpush2.msra.mxu0 0.0
        %517 = vmatprep.subr.mxu0 0.0
        %518 = vmatpush2.msra.mxu0 0.0
        %519 = vmatprep.subr.mxu0 0.0
        %520 = vmatpush2.msra.mxu0 0.0
        %521 = vmatprep.subr.mxu0 0.0
        %522 = vmatpush2.msra.mxu0 0.0
        %523 = vmatprep.subr.mxu0 0.0
        %524 = vmatpush2.msra.mxu0 0.0
        %525 = vmatprep.subr.mxu0 0.0
        %526 = vmatpush2.msra.mxu0 0.0
        %527 = vmatprep.subr.mxu0 0.0
        %528 = vmatpush2.msra.mxu0 0.0
        %529 = vmatprep.subr.mxu0 0.0
        %530 = vmatpush2.msra.mxu0 0.0
        %531 = vmatprep.subr.mxu0 0.0
        %532 = vmatpush2.msra.mxu0 0.0
        %533 = vmatprep.subr.mxu0 0.0
        %534 = vmatpush2.msra.mxu0 0.0
        %535 = vmatprep.subr.mxu0 0.0
        %536 = vmatpush2.msra.mxu0 0.0
        %537 = vmatprep.subr.mxu0 0.0
        %538 = vmatpush2.msra.mxu0 0.0
        %539 = vmatprep.subr.mxu0 0.0
        %540 = vmatpush2.msra.mxu0 0.0
        %541 = vmatprep.mubr.f32.mxu0 0.0
        %542 = vmatmul.mubr.f32.gmra.mxu0 %v475
        %v543 = vpop.f32.mrf.mxu0
        %v544 = vadd.f32 0.0, %v543
        %v545 = vpop.f32.mrf.mxu0
        %v546 = vadd.f32 0.0, %v545
        %547 = vdwg.mxu0
        %v548 = vld [vmem:[%s408] sm:$0xff]
        %v549 = vld [vmem:[#allocation2] sm:$0xf]
        %vm550 = vcmask 1043456
        %v551 = vsel %vm550, %v544, 0.0
        %v552 = vsel %vm550, %v546, 0.0
        %v553 = vadd.f32 %v551, %v552
        %554 = vadd.xlane.f32.xlu0 %v553
        %v555 = vpop.xlane.xlu0 %554
        %v556 = vadd.f32 %v549, %v555
        %557 = vst.msk [vmem:[#allocation2] sm:$0xf] %vm466, %v556
        %v558 = vld [vmem:[#allocation3] sm:$0xf]
        %v559 = vsel %vm550, %v544, -inf
        %v560 = vsel %vm550, %v546, -inf
        %v561 = vmax.f32 %v559, %v560
        %562 = vmax.xlane.f32.xlu0 %v561
        %v563 = vpop.xlane.xlu0 %562
        %v564 = vmax.f32 %v558, %v563
        %565 = vst.msk [vmem:[#allocation3] sm:$0xf] %vm466, %v564
        %v566 = vld [vmem:[#allocation4] sm:$0xf]
        %v568 = vcombine.high %v548, %v548
        %v570 = vsel %vm550, %v548, 0.0
        %v571 = vsel %vm550, %v568, 0.0
        %v572 = vadd.f32 %v570, %v571
        %573 = vadd.xlane.f32.xlu0 %v572
        %v574 = vpop.xlane.xlu0 %573
        %v575 = vadd.f32 %v566, %v574
        %576 = vst.msk [vmem:[#allocation4] sm:$0xf] %vm466, %v575
        %v577 = vld [vmem:[#allocation5] sm:$0xf]
        %v578 = vsel %vm550, %v548, -inf
        %v579 = vsel %vm550, %v568, -inf
        %v580 = vmax.f32 %v578, %v579
        %581 = vmax.xlane.f32.xlu0 %v580
        %v582 = vpop.xlane.xlu0 %581
        %v583 = vmax.f32 %v577, %v582
        %584 = vst.msk [vmem:[#allocation5] sm:$0xf] %vm466, %v583
        %v585 = vld [vmem:[#allocation2] sm:$0xf]
        %v586 = vld [vmem:[#allocation3] sm:$0xf]
        %v587 = vld [vmem:[#allocation4] sm:$0xf]
        %v588 = vld [vmem:[#allocation5] sm:$0xf]
        %v589 = vld [vmem:[%s5] sm:$0xff]
        %v590 = vld [vmem:[%s6] sm:$0xff]
        %v591 = vld [vmem:[%s7] sm:$0xff]
        %v592 = vld [vmem:[%s8] sm:$0xf]
        %v593 = vld [vmem:[%s9] sm:$0xf]
        %v594 = vld [vmem:[%s10] sm:$0xf]
        %v595 = vld [vmem:[%s11] sm:$0xf]
        %v596 = vmul.f32 %v585, 0.00390625
        %598 = vrot.lane.b32.xlu0 %v586, 1
        %v599 = vpop.permute.xlu0 %598
        %vm601 = vcmask 7168
        %v602 = vsel %vm601, %v596, %v599
        %v603 = vmul.f32 %v587, 0.00390625
        %605 = vrot.lane.b32.xlu0 %v588, 1
        %v606 = vpop.permute.xlu0 %605
        %v608 = vsel %vm601, %v603, %v606
        %vm609 = vcmask 31744
        %v611 = vsel %vm609, %v590, 0
        %v614 = vsel %vm550, %v608, 0
        %616 = vmatprep.subr.mxu0 0.0
        %617 = vmatpush1.msra.mxu0 0.0
        %618 = vmatprep.subr.mxu0 0.0
        %619 = vmatpush1.msra.mxu0 0.0
        %620 = vmatprep.subr.mxu0 0.0
        %621 = vmatpush1.msra.mxu0 0.0
        %622 = vmatprep.subr.mxu0 0.0
        %623 = vmatpush1.msra.mxu0 0.0
        %624 = vmatprep.subr.mxu0 0.0
        %625 = vmatpush1.msra.mxu0 0.0
        %626 = vmatprep.subr.mxu0 0.0
        %627 = vmatpush1.msra.mxu0 0.0
        %628 = vmatprep.subr.mxu0 0.0
        %629 = vmatpush1.msra.mxu0 0.0
        %630 = vmatprep.subr.mxu0 0.0
        %631 = vmatpush1.msra.mxu0 0.0
        %632 = vmatprep.subr.mxu0 0.0
        %633 = vmatpush1.msra.mxu0 0.0
        %634 = vmatprep.subr.mxu0 0.0
        %635 = vmatpush1.msra.mxu0 0.0
        %636 = vmatprep.subr.mxu0 0.0
        %637 = vmatpush1.msra.mxu0 0.0
        %638 = vmatprep.subr.mxu0 0.0
        %639 = vmatpush1.msra.mxu0 0.0
        %640 = vmatprep.subr.mxu0 0.0
        %641 = vmatpush1.msra.mxu0 0.0
        %642 = vmatprep.subr.mxu0 0.0
        %643 = vmatpush1.msra.mxu0 0.0
        %644 = vmatprep.subr.mxu0 0.0
        %645 = vmatpush1.msra.mxu0 0.0
        %646 = vmatprep.subr.mxu0 0.0
        %647 = vmatpush1.msra.mxu0 %v614
        %648 = vmatprep.subr.mxu0 0.0
        %649 = vmatpush2.msra.mxu0 0.0
        %650 = vmatprep.subr.mxu0 0.0
        %651 = vmatpush2.msra.mxu0 0.0
        %652 = vmatprep.subr.mxu0 0.0
        %653 = vmatpush2.msra.mxu0 0.0
        %654 = vmatprep.subr.mxu0 0.0
        %655 = vmatpush2.msra.mxu0 0.0
        %656 = vmatprep.subr.mxu0 0.0
        %657 = vmatpush2.msra.mxu0 0.0
        %658 = vmatprep.subr.mxu0 0.0
        %659 = vmatpush2.msra.mxu0 0.0
        %660 = vmatprep.subr.mxu0 0.0
        %661 = vmatpush2.msra.mxu0 0.0
        %662 = vmatprep.subr.mxu0 0.0
        %663 = vmatpush2.msra.mxu0 0.0
        %664 = vmatprep.subr.mxu0 0.0
        %665 = vmatpush2.msra.mxu0 0.0
        %666 = vmatprep.subr.mxu0 0.0
        %667 = vmatpush2.msra.mxu0 0.0
        %668 = vmatprep.subr.mxu0 0.0
        %669 = vmatpush2.msra.mxu0 0.0
        %670 = vmatprep.subr.mxu0 0.0
        %671 = vmatpush2.msra.mxu0 0.0
        %672 = vmatprep.subr.mxu0 0.0
        %673 = vmatpush2.msra.mxu0 0.0
        %674 = vmatprep.subr.mxu0 0.0
        %675 = vmatpush2.msra.mxu0 0.0
        %676 = vmatprep.subr.mxu0 0.0
        %677 = vmatpush2.msra.mxu0 0.0
        %678 = vmatprep.subr.mxu0 0.0
        %679 = vmatpush2.msra.mxu0 0.0
        %680 = vmatprep.mubr.f32.mxu0 0.0
        %681 = vmatmul.mubr.f32.gmra.mxu0 %v611
        %v682 = vpop.f32.mrf.mxu0
        %v683 = vadd.f32 0.0, %v682
        %v684 = vpop.f32.mrf.mxu0
        %685 = vdwg.mxu0
        %v687 = vsel %vm609, %v589, 0
        %v690 = vsel %vm550, %v602, 0
        %692 = vmatprep.subr.mxu0 0.0
        %693 = vmatpush1.msra.mxu0 0.0
        %694 = vmatprep.subr.mxu0 0.0
        %695 = vmatpush1.msra.mxu0 0.0
        %696 = vmatprep.subr.mxu0 0.0
        %697 = vmatpush1.msra.mxu0 0.0
        %698 = vmatprep.subr.mxu0 0.0
        %699 = vmatpush1.msra.mxu0 0.0
        %700 = vmatprep.subr.mxu0 0.0
        %701 = vmatpush1.msra.mxu0 0.0
        %702 = vmatprep.subr.mxu0 0.0
        %703 = vmatpush1.msra.mxu0 0.0
        %704 = vmatprep.subr.mxu0 0.0
        %705 = vmatpush1.msra.mxu0 0.0
        %706 = vmatprep.subr.mxu0 0.0
        %707 = vmatpush1.msra.mxu0 0.0
        %708 = vmatprep.subr.mxu0 0.0
        %709 = vmatpush1.msra.mxu0 0.0
        %710 = vmatprep.subr.mxu0 0.0
        %711 = vmatpush1.msra.mxu0 0.0
        %712 = vmatprep.subr.mxu0 0.0
        %713 = vmatpush1.msra.mxu0 0.0
        %714 = vmatprep.subr.mxu0 0.0
        %715 = vmatpush1.msra.mxu0 0.0
        %716 = vmatprep.subr.mxu0 0.0
        %717 = vmatpush1.msra.mxu0 0.0
        %718 = vmatprep.subr.mxu0 0.0
        %719 = vmatpush1.msra.mxu0 0.0
        %720 = vmatprep.subr.mxu0 0.0
        %721 = vmatpush1.msra.mxu0 0.0
        %722 = vmatprep.subr.mxu0 0.0
        %723 = vmatpush1.msra.mxu0 %v690
        %724 = vmatprep.subr.mxu0 0.0
        %725 = vmatpush2.msra.mxu0 0.0
        %726 = vmatprep.subr.mxu0 0.0
        %727 = vmatpush2.msra.mxu0 0.0
        %728 = vmatprep.subr.mxu0 0.0
        %729 = vmatpush2.msra.mxu0 0.0
        %730 = vmatprep.subr.mxu0 0.0
        %731 = vmatpush2.msra.mxu0 0.0
        %732 = vmatprep.subr.mxu0 0.0
        %733 = vmatpush2.msra.mxu0 0.0
        %734 = vmatprep.subr.mxu0 0.0
        %735 = vmatpush2.msra.mxu0 0.0
        %736 = vmatprep.subr.mxu0 0.0
        %737 = vmatpush2.msra.mxu0 0.0
        %738 = vmatprep.subr.mxu0 0.0
        %739 = vmatpush2.msra.mxu0 0.0
        %740 = vmatprep.subr.mxu0 0.0
        %741 = vmatpush2.msra.mxu0 0.0
        %742 = vmatprep.subr.mxu0 0.0
        %743 = vmatpush2.msra.mxu0 0.0
        %744 = vmatprep.subr.mxu0 0.0
        %745 = vmatpush2.msra.mxu0 0.0
        %746 = vmatprep.subr.mxu0 0.0
        %747 = vmatpush2.msra.mxu0 0.0
        %748 = vmatprep.subr.mxu0 0.0
        %749 = vmatpush2.msra.mxu0 0.0
        %750 = vmatprep.subr.mxu0 0.0
        %751 = vmatpush2.msra.mxu0 0.0
        %752 = vmatprep.subr.mxu0 0.0
        %753 = vmatpush2.msra.mxu0 0.0
        %754 = vmatprep.subr.mxu0 0.0
        %755 = vmatpush2.msra.mxu0 0.0
        %756 = vmatprep.mubr.f32.mxu0 0.0
        %757 = vmatmul.mubr.f32.gmra.mxu0 %v687
        %v758 = vpop.f32.mrf.mxu0
        %v759 = vadd.f32 %v683, %v758
        %v760 = vpop.f32.mrf.mxu0
        %761 = vdwg.mxu0
        %763 = vset.pattern.permute.xlu0 0
        %764 = vperm.xlu0 %763, %v591
        %v765 = vpop.permute.xlu0 %764
        %v767 = vadd.f32 %v759, %v765
        %v768 = vmax.f32 %v767, 0.0
        %770 = vset.pattern.permute.xlu0 0
        %771 = vperm.xlu0 %770, %v594
        %v772 = vpop.permute.xlu0 %771
        %v775 = vsel %vm473, %v592, 0
        %777 = vmatprep.subr.mxu0 0.0
        %778 = vmatpush1.msra.mxu0 0.0
        %779 = vmatprep.subr.mxu0 0.0
        %780 = vmatpush1.msra.mxu0 0.0
        %781 = vmatprep.subr.mxu0 0.0
        %782 = vmatpush1.msra.mxu0 0.0
        %783 = vmatprep.subr.mxu0 0.0
        %784 = vmatpush1.msra.mxu0 0.0
        %785 = vmatprep.subr.mxu0 0.0
        %786 = vmatpush1.msra.mxu0 0.0
        %787 = vmatprep.subr.mxu0 0.0
        %788 = vmatpush1.msra.mxu0 0.0
        %789 = vmatprep.subr.mxu0 0.0
        %790 = vmatpush1.msra.mxu0 0.0
        %791 = vmatprep.subr.mxu0 0.0
        %792 = vmatpush1.msra.mxu0 0.0
        %793 = vmatprep.subr.mxu0 0.0
        %794 = vmatpush1.msra.mxu0 0.0
        %795 = vmatprep.subr.mxu0 0.0
        %796 = vmatpush1.msra.mxu0 0.0
        %797 = vmatprep.subr.mxu0 0.0
        %798 = vmatpush1.msra.mxu0 0.0
        %799 = vmatprep.subr.mxu0 0.0
        %800 = vmatpush1.msra.mxu0 0.0
        %801 = vmatprep.subr.mxu0 0.0
        %802 = vmatpush1.msra.mxu0 0.0
        %803 = vmatprep.subr.mxu0 0.0
        %804 = vmatpush1.msra.mxu0 0.0
        %805 = vmatprep.subr.mxu0 0.0
        %806 = vmatpush1.msra.mxu0 0.0
        %807 = vmatprep.subr.mxu0 0.0
        %808 = vmatpush1.msra.mxu0 %v768
        %809 = vmatprep.subr.mxu0 0.0
        %810 = vmatpush2.msra.mxu0 0.0
        %811 = vmatprep.subr.mxu0 0.0
        %812 = vmatpush2.msra.mxu0 0.0
        %813 = vmatprep.subr.mxu0 0.0
        %814 = vmatpush2.msra.mxu0 0.0
        %815 = vmatprep.subr.mxu0 0.0
        %816 = vmatpush2.msra.mxu0 0.0
        %817 = vmatprep.subr.mxu0 0.0
        %818 = vmatpush2.msra.mxu0 0.0
        %819 = vmatprep.subr.mxu0 0.0
        %820 = vmatpush2.msra.mxu0 0.0
        %821 = vmatprep.subr.mxu0 0.0
        %822 = vmatpush2.msra.mxu0 0.0
        %823 = vmatprep.subr.mxu0 0.0
        %824 = vmatpush2.msra.mxu0 0.0
        %825 = vmatprep.subr.mxu0 0.0
        %826 = vmatpush2.msra.mxu0 0.0
        %827 = vmatprep.subr.mxu0 0.0
        %828 = vmatpush2.msra.mxu0 0.0
        %829 = vmatprep.subr.mxu0 0.0
        %830 = vmatpush2.msra.mxu0 0.0
        %831 = vmatprep.subr.mxu0 0.0
        %832 = vmatpush2.msra.mxu0 0.0
        %833 = vmatprep.subr.mxu0 0.0
        %834 = vmatpush2.msra.mxu0 0.0
        %835 = vmatprep.subr.mxu0 0.0
        %836 = vmatpush2.msra.mxu0 0.0
        %837 = vmatprep.subr.mxu0 0.0
        %838 = vmatpush2.msra.mxu0 0.0
        %839 = vmatprep.subr.mxu0 0.0
        %840 = vmatpush2.msra.mxu0 0.0
        %841 = vmatprep.mubr.f32.mxu0 0.0
        %842 = vmatmul.mubr.f32.gmra.mxu0 %v775
        %v843 = vpop.f32.mrf.mxu0
        %v844 = vadd.f32 %v772, %v843
        %v845 = vpop.f32.mrf.mxu0
        %846 = vdwg.mxu0
        %v847 = vxor.u32 %v844, 2147483648
        %v848 = vmul.f32 %v847, 1.442695
        %v849 = vpow.pop %v848
        %v850 = vadd.f32 %v849, 1.0
        %v851 = vrcp.pop %v850
        %v852 = vmul.f32 1.0, %v851
        %vm853 = vcmask 11264
        %v854 = vsel %vm853, %v852, 0.0
        %855 = vadd.xlane.f32.xlu0 %v854
        %v856 = vpop.xlane.xlu0 %855
        %858 = vset.pattern.permute.xlu0 0
        %859 = vperm.xlu0 %858, %v595
        %v860 = vpop.permute.xlu0 %859
        %v863 = vsel %vm473, %v593, 0
        %865 = vmatprep.subr.mxu0 0.0
        %866 = vmatpush1.msra.mxu0 0.0
        %867 = vmatprep.subr.mxu0 0.0
        %868 = vmatpush1.msra.mxu0 0.0
        %869 = vmatprep.subr.mxu0 0.0
        %870 = vmatpush1.msra.mxu0 0.0
        %871 = vmatprep.subr.mxu0 0.0
        %872 = vmatpush1.msra.mxu0 0.0
        %873 = vmatprep.subr.mxu0 0.0
        %874 = vmatpush1.msra.mxu0 0.0
        %875 = vmatprep.subr.mxu0 0.0
        %876 = vmatpush1.msra.mxu0 0.0
        %877 = vmatprep.subr.mxu0 0.0
        %878 = vmatpush1.msra.mxu0 0.0
        %879 = vmatprep.subr.mxu0 0.0
        %880 = vmatpush1.msra.mxu0 0.0
        %881 = vmatprep.subr.mxu0 0.0
        %882 = vmatpush1.msra.mxu0 0.0
        %883 = vmatprep.subr.mxu0 0.0
        %884 = vmatpush1.msra.mxu0 0.0
        %885 = vmatprep.subr.mxu0 0.0
        %886 = vmatpush1.msra.mxu0 0.0
        %887 = vmatprep.subr.mxu0 0.0
        %888 = vmatpush1.msra.mxu0 0.0
        %889 = vmatprep.subr.mxu0 0.0
        %890 = vmatpush1.msra.mxu0 0.0
        %891 = vmatprep.subr.mxu0 0.0
        %892 = vmatpush1.msra.mxu0 0.0
        %893 = vmatprep.subr.mxu0 0.0
        %894 = vmatpush1.msra.mxu0 0.0
        %895 = vmatprep.subr.mxu0 0.0
        %896 = vmatpush1.msra.mxu0 %v768
        %897 = vmatprep.subr.mxu0 0.0
        %898 = vmatpush2.msra.mxu0 0.0
        %899 = vmatprep.subr.mxu0 0.0
        %900 = vmatpush2.msra.mxu0 0.0
        %901 = vmatprep.subr.mxu0 0.0
        %902 = vmatpush2.msra.mxu0 0.0
        %903 = vmatprep.subr.mxu0 0.0
        %904 = vmatpush2.msra.mxu0 0.0
        %905 = vmatprep.subr.mxu0 0.0
        %906 = vmatpush2.msra.mxu0 0.0
        %907 = vmatprep.subr.mxu0 0.0
        %908 = vmatpush2.msra.mxu0 0.0
        %909 = vmatprep.subr.mxu0 0.0
        %910 = vmatpush2.msra.mxu0 0.0
        %911 = vmatprep.subr.mxu0 0.0
        %912 = vmatpush2.msra.mxu0 0.0
        %913 = vmatprep.subr.mxu0 0.0
        %914 = vmatpush2.msra.mxu0 0.0
        %915 = vmatprep.subr.mxu0 0.0
        %916 = vmatpush2.msra.mxu0 0.0
        %917 = vmatprep.subr.mxu0 0.0
        %918 = vmatpush2.msra.mxu0 0.0
        %919 = vmatprep.subr.mxu0 0.0
        %920 = vmatpush2.msra.mxu0 0.0
        %921 = vmatprep.subr.mxu0 0.0
        %922 = vmatpush2.msra.mxu0 0.0
        %923 = vmatprep.subr.mxu0 0.0
        %924 = vmatpush2.msra.mxu0 0.0
        %925 = vmatprep.subr.mxu0 0.0
        %926 = vmatpush2.msra.mxu0 0.0
        %927 = vmatprep.subr.mxu0 0.0
        %928 = vmatpush2.msra.mxu0 0.0
        %929 = vmatprep.mubr.f32.mxu0 0.0
        %930 = vmatmul.mubr.f32.gmra.mxu0 %v863
        %v931 = vpop.f32.mrf.mxu0
        %v932 = vadd.f32 %v860, %v931
        %v933 = vpop.f32.mrf.mxu0
        %934 = vdwg.mxu0
        %v935 = vxor.u32 %v932, 2147483648
        %v936 = vmul.f32 %v935, 1.442695
        %v937 = vpow.pop %v936
        %v938 = vadd.f32 %v937, 1.0
        %v939 = vrcp.pop %v938
        %v940 = vmul.f32 1.0, %v939
        %v941 = vsel %vm853, %v940, 0.0
        %942 = vadd.xlane.f32.xlu0 %v941
        %v943 = vpop.xlane.xlu0 %942
        %v944 = vld [vmem:[%s462] sm:$0xff]
        %v945 = vld [vmem:[%s462 + $0x8] sm:$0xff]
        %946 = vmatprep.subr.mxu0 0.0
        %947 = vmatpush1.msra.mxu0 0.0
        %948 = vmatprep.subr.mxu0 0.0
        %949 = vmatpush1.msra.mxu0 0.0
        %950 = vmatprep.subr.mxu0 0.0
        %951 = vmatpush1.msra.mxu0 0.0
        %952 = vmatprep.subr.mxu0 0.0
        %953 = vmatpush1.msra.mxu0 0.0
        %954 = vmatprep.subr.mxu0 0.0
        %955 = vmatpush1.msra.mxu0 0.0
        %956 = vmatprep.subr.mxu0 0.0
        %957 = vmatpush1.msra.mxu0 0.0
        %958 = vmatprep.subr.mxu0 0.0
        %959 = vmatpush1.msra.mxu0 0.0
        %960 = vmatprep.subr.mxu0 0.0
        %961 = vmatpush1.msra.mxu0 0.0
        %962 = vmatprep.subr.mxu0 0.0
        %963 = vmatpush1.msra.mxu0 0.0
        %964 = vmatprep.subr.mxu0 0.0
        %965 = vmatpush1.msra.mxu0 0.0
        %966 = vmatprep.subr.mxu0 0.0
        %967 = vmatpush1.msra.mxu0 0.0
        %968 = vmatprep.subr.mxu0 0.0
        %969 = vmatpush1.msra.mxu0 0.0
        %970 = vmatprep.subr.mxu0 0.0
        %971 = vmatpush1.msra.mxu0 0.0
        %972 = vmatprep.subr.mxu0 0.0
        %973 = vmatpush1.msra.mxu0 0.0
        %974 = vmatprep.subr.mxu0 0.0
        %975 = vmatpush1.msra.mxu0 0.0
        %976 = vmatprep.subr.mxu0 %v945
        %977 = vmatpush1.msra.mxu0 %v944
        %978 = vmatprep.subr.mxu0 0.0
        %979 = vmatpush2.msra.mxu0 0.0
        %980 = vmatprep.subr.mxu0 0.0
        %981 = vmatpush2.msra.mxu0 0.0
        %982 = vmatprep.subr.mxu0 0.0
        %983 = vmatpush2.msra.mxu0 0.0
        %984 = vmatprep.subr.mxu0 0.0
        %985 = vmatpush2.msra.mxu0 0.0
        %986 = vmatprep.subr.mxu0 0.0
        %987 = vmatpush2.msra.mxu0 0.0
        %988 = vmatprep.subr.mxu0 0.0
        %989 = vmatpush2.msra.mxu0 0.0
        %990 = vmatprep.subr.mxu0 0.0
        %991 = vmatpush2.msra.mxu0 0.0
        %992 = vmatprep.subr.mxu0 0.0
        %993 = vmatpush2.msra.mxu0 0.0
        %994 = vmatprep.subr.mxu0 0.0
        %995 = vmatpush2.msra.mxu0 0.0
        %996 = vmatprep.subr.mxu0 0.0
        %997 = vmatpush2.msra.mxu0 0.0
        %998 = vmatprep.subr.mxu0 0.0
        %999 = vmatpush2.msra.mxu0 0.0
        %1000 = vmatprep.subr.mxu0 0.0
        %1001 = vmatpush2.msra.mxu0 0.0
        %1002 = vmatprep.subr.mxu0 0.0
        %1003 = vmatpush2.msra.mxu0 0.0
        %1004 = vmatprep.subr.mxu0 0.0
        %1005 = vmatpush2.msra.mxu0 0.0
        %1006 = vmatprep.subr.mxu0 0.0
        %1007 = vmatpush2.msra.mxu0 0.0
        %1008 = vmatprep.subr.mxu0 0.0
        %1009 = vmatpush2.msra.mxu0 0.0
        %1010 = vmatprep.mubr.f32.mxu0 0.0
        %1011 = vmatmul.mubr.f32.gmra.mxu0 %v475
        %v1012 = vpop.f32.mrf.mxu0
        %v1013 = vadd.f32 0.0, %v1012
        %v1014 = vpop.f32.mrf.mxu0
        %v1015 = vadd.f32 0.0, %v1014
        %1016 = vdwg.mxu0
        %v1017 = vmul.f32 %v1013, %v856
        %v1018 = vmul.f32 %v1015, %v856
        %v1019 = vld [vmem:[%s408] sm:$0xff]
        %v1022 = vunpack.c.l.s4 839922192
        %v1023 = vunpack.c.0.s8 %v1022
        %v1024 = vlaneseq
        %v1025 = vshrl.u32 %v1024, 7
        %v1026 = vsub.s32 %v1023, %v1025
        %v1027 = vrot.slane %v943, %v1026
        %v1029 = vmul.f32 %v1019, %v1027
        %v1031 = vcombine.high %v1029, %v1029
        %v1033 = vsel %vm609, %v465, 0
        %v1035 = vsel %vm550, %v1029, 0
        %v1037 = vsel %vm550, %v1031, 0
        %1039 = vmatprep.subr.mxu0 0.0
        %1040 = vmatpush1.msra.mxu0 0.0
        %1041 = vmatprep.subr.mxu0 0.0
        %1042 = vmatpush1.msra.mxu0 0.0
        %1043 = vmatprep.subr.mxu0 0.0
        %1044 = vmatpush1.msra.mxu0 0.0
        %1045 = vmatprep.subr.mxu0 0.0
        %1046 = vmatpush1.msra.mxu0 0.0
        %1047 = vmatprep.subr.mxu0 0.0
        %1048 = vmatpush1.msra.mxu0 0.0
        %1049 = vmatprep.subr.mxu0 0.0
        %1050 = vmatpush1.msra.mxu0 0.0
        %1051 = vmatprep.subr.mxu0 0.0
        %1052 = vmatpush1.msra.mxu0 0.0
        %1053 = vmatprep.subr.mxu0 0.0
        %1054 = vmatpush1.msra.mxu0 0.0
        %1055 = vmatprep.subr.mxu0 0.0
        %1056 = vmatpush1.msra.mxu0 0.0
        %1057 = vmatprep.subr.mxu0 0.0
        %1058 = vmatpush1.msra.mxu0 0.0
        %1059 = vmatprep.subr.mxu0 0.0
        %1060 = vmatpush1.msra.mxu0 0.0
        %1061 = vmatprep.subr.mxu0 0.0
        %1062 = vmatpush1.msra.mxu0 0.0
        %1063 = vmatprep.subr.mxu0 0.0
        %1064 = vmatpush1.msra.mxu0 0.0
        %1065 = vmatprep.subr.mxu0 0.0
        %1066 = vmatpush1.msra.mxu0 0.0
        %1067 = vmatprep.subr.mxu0 0.0
        %1068 = vmatpush1.msra.mxu0 0.0
        %1069 = vmatprep.subr.mxu0 %v1037
        %1070 = vmatpush1.msra.mxu0 %v1035
        %1071 = vmatprep.subr.mxu0 0.0
        %1072 = vmatpush2.msra.mxu0 0.0
        %1073 = vmatprep.subr.mxu0 0.0
        %1074 = vmatpush2.msra.mxu0 0.0
        %1075 = vmatprep.subr.mxu0 0.0
        %1076 = vmatpush2.msra.mxu0 0.0
        %1077 = vmatprep.subr.mxu0 0.0
        %1078 = vmatpush2.msra.mxu0 0.0
        %1079 = vmatprep.subr.mxu0 0.0
        %1080 = vmatpush2.msra.mxu0 0.0
        %1081 = vmatprep.subr.mxu0 0.0
        %1082 = vmatpush2.msra.mxu0 0.0
        %1083 = vmatprep.subr.mxu0 0.0
        %1084 = vmatpush2.msra.mxu0 0.0
        %1085 = vmatprep.subr.mxu0 0.0
        %1086 = vmatpush2.msra.mxu0 0.0
        %1087 = vmatprep.subr.mxu0 0.0
        %1088 = vmatpush2.msra.mxu0 0.0
        %1089 = vmatprep.subr.mxu0 0.0
        %1090 = vmatpush2.msra.mxu0 0.0
        %1091 = vmatprep.subr.mxu0 0.0
        %1092 = vmatpush2.msra.mxu0 0.0
        %1093 = vmatprep.subr.mxu0 0.0
        %1094 = vmatpush2.msra.mxu0 0.0
        %1095 = vmatprep.subr.mxu0 0.0
        %1096 = vmatpush2.msra.mxu0 0.0
        %1097 = vmatprep.subr.mxu0 0.0
        %1098 = vmatpush2.msra.mxu0 0.0
        %1099 = vmatprep.subr.mxu0 0.0
        %1100 = vmatpush2.msra.mxu0 0.0
        %1101 = vmatprep.subr.mxu0 0.0
        %1102 = vmatpush2.msra.mxu0 0.0
        %1103 = vmatprep.mubr.f32.mxu0 0.0
        %1104 = vmatmul.mubr.f32.gmra.mxu0 %v1033
        %v1105 = vpop.f32.mrf.mxu0
        %v1106 = vadd.f32 0.0, %v1105
        %v1107 = vpop.f32.mrf.mxu0
        %v1108 = vadd.f32 0.0, %v1107
        %1109 = vdwg.mxu0
        %v1111 = vsel %vm609, %v464, 0
        %v1114 = vsel %vm550, %v1017, 0
        %v1117 = vsel %vm550, %v1018, 0
        %1119 = vmatprep.subr.mxu0 0.0
        %1120 = vmatpush1.msra.mxu0 0.0
        %1121 = vmatprep.subr.mxu0 0.0
        %1122 = vmatpush1.msra.mxu0 0.0
        %1123 = vmatprep.subr.mxu0 0.0
        %1124 = vmatpush1.msra.mxu0 0.0
        %1125 = vmatprep.subr.mxu0 0.0
        %1126 = vmatpush1.msra.mxu0 0.0
        %1127 = vmatprep.subr.mxu0 0.0
        %1128 = vmatpush1.msra.mxu0 0.0
        %1129 = vmatprep.subr.mxu0 0.0
        %1130 = vmatpush1.msra.mxu0 0.0
        %1131 = vmatprep.subr.mxu0 0.0
        %1132 = vmatpush1.msra.mxu0 0.0
        %1133 = vmatprep.subr.mxu0 0.0
        %1134 = vmatpush1.msra.mxu0 0.0
        %1135 = vmatprep.subr.mxu0 0.0
        %1136 = vmatpush1.msra.mxu0 0.0
        %1137 = vmatprep.subr.mxu0 0.0
        %1138 = vmatpush1.msra.mxu0 0.0
        %1139 = vmatprep.subr.mxu0 0.0
        %1140 = vmatpush1.msra.mxu0 0.0
        %1141 = vmatprep.subr.mxu0 0.0
        %1142 = vmatpush1.msra.mxu0 0.0
        %1143 = vmatprep.subr.mxu0 0.0
        %1144 = vmatpush1.msra.mxu0 0.0
        %1145 = vmatprep.subr.mxu0 0.0
        %1146 = vmatpush1.msra.mxu0 0.0
        %1147 = vmatprep.subr.mxu0 0.0
        %1148 = vmatpush1.msra.mxu0 0.0
        %1149 = vmatprep.subr.mxu0 %v1117
        %1150 = vmatpush1.msra.mxu0 %v1114
        %1151 = vmatprep.subr.mxu0 0.0
        %1152 = vmatpush2.msra.mxu0 0.0
        %1153 = vmatprep.subr.mxu0 0.0
        %1154 = vmatpush2.msra.mxu0 0.0
        %1155 = vmatprep.subr.mxu0 0.0
        %1156 = vmatpush2.msra.mxu0 0.0
        %1157 = vmatprep.subr.mxu0 0.0
        %1158 = vmatpush2.msra.mxu0 0.0
        %1159 = vmatprep.subr.mxu0 0.0
        %1160 = vmatpush2.msra.mxu0 0.0
        %1161 = vmatprep.subr.mxu0 0.0
        %1162 = vmatpush2.msra.mxu0 0.0
        %1163 = vmatprep.subr.mxu0 0.0
        %1164 = vmatpush2.msra.mxu0 0.0
        %1165 = vmatprep.subr.mxu0 0.0
        %1166 = vmatpush2.msra.mxu0 0.0
        %1167 = vmatprep.subr.mxu0 0.0
        %1168 = vmatpush2.msra.mxu0 0.0
        %1169 = vmatprep.subr.mxu0 0.0
        %1170 = vmatpush2.msra.mxu0 0.0
        %1171 = vmatprep.subr.mxu0 0.0
        %1172 = vmatpush2.msra.mxu0 0.0
        %1173 = vmatprep.subr.mxu0 0.0
        %1174 = vmatpush2.msra.mxu0 0.0
        %1175 = vmatprep.subr.mxu0 0.0
        %1176 = vmatpush2.msra.mxu0 0.0
        %1177 = vmatprep.subr.mxu0 0.0
        %1178 = vmatpush2.msra.mxu0 0.0
        %1179 = vmatprep.subr.mxu0 0.0
        %1180 = vmatpush2.msra.mxu0 0.0
        %1181 = vmatprep.subr.mxu0 0.0
        %1182 = vmatpush2.msra.mxu0 0.0
        %1183 = vmatprep.mubr.f32.mxu0 0.0
        %1184 = vmatmul.mubr.f32.gmra.mxu0 %v1111
        %v1185 = vpop.f32.mrf.mxu0
        %v1186 = vadd.f32 %v1106, %v1185
        %v1187 = vpop.f32.mrf.mxu0
        %v1188 = vadd.f32 %v1108, %v1187
        %1189 = vdwg.mxu0
        %v1192 = vcombine.low %v1186, %v1188
        %1194 = vst [vmem:[%s457] sm:$0xff] %v1192
        %s1195 = sand.u32 %s300, 1
        %s1196 = scalar_lea.sflag [#allocation8], %s1195
        %s1197 = sand.u32 %s300, 1
        %s1198 = smul.addr %s1197, 8
        %s1199 = scalar_lea.vmem [#allocation11], %s1198
        // Predicated region
        $region77: #{tpu_custom_call.1} parent=67 // pred_check
          %p1200 = pneg %p310
        $region78: #{tpu_custom_call.1} parent=67 // pred_check_branch
          %1202 = sbr.rel (%p1200) target = $region80
        $region79: #{tpu_custom_call.1} parent=67 // pred_region
          %s1204 = ssub.s32 128, 128
          %1205 = vsyncadd %s1196, %s1204
          %s1206 = smul.addr %s30, 2
          %s1207 = smul.addr %s1206, 64
          %s1208 = scalar_lea.hbm %s12, %s1207
          %s1210 = sshll.u32 %s1199, 4
          %s1211 = int_to_ptr.vmem [resolvable:$true] %s1210
          %1213 = dma.vmem_to_hbm [thread:$0]  %s1211, 128, %s1208, %s1196
        $region80: #{tpu_custom_call.1} parent=67 // pred_fallthru
          _
      $region68: #{tpu_custom_call.1} parent=5 // pred_fallthru
        _
      %p1214 = scmp.le.s32.totalorder 2, %s25
      // Predicated region
      $region81: #{tpu_custom_call.1} parent=5 // pred_check
        %p1215 = pneg %p1214
      $region82: #{tpu_custom_call.1} parent=5 // pred_check_branch
        %1217 = sbr.rel (%p1215) target = $region84
      $region83: #{tpu_custom_call.1} parent=5 // pred_region
        %s1218 = ssub.s32 %s25, 2
        // Predicated region
        $region85: #{tpu_custom_call.1} parent=83 // pred_check
          %p1219 = pneg %p316
        $region86: #{tpu_custom_call.1} parent=83 // pred_check_branch
          %1221 = sbr.rel (%p1219) target = $region88
        $region87: #{tpu_custom_call.1} parent=83 // pred_region
          %s1222 = sand.u32 %s301, 1
          %s1223 = scalar_lea.sflag [#allocation8], %s1222
          %s1224 = sand.u32 %s301, 1
          %s1225 = smul.addr %s1224, 8
          %s1226 = scalar_lea.vmem [#allocation11], %s1225
          %1227 = dma.done %s1223, 128
        $region88: #{tpu_custom_call.1} parent=83 // pred_fallthru
          _
      $region84: #{tpu_custom_call.1} parent=5 // pred_fallthru
        _
    $region6: #{tpu_custom_call.1} parent=1 // loop_footer
      %s29 = sadd.s32 1, %s25
    $region7: #{tpu_custom_call.1} parent=1 // loop_footer_branch
      %24 = sbr.rel target = $region3
    $region8: #{tpu_custom_call.1} parent=1 // loop_exit
      _
    %1228 = vsyncpa [#allocation7], 1
    %s1229 = scalar_lea.sflag [#allocation7], 1
    %1230 = vsyncpa %s1229, 1
    %1231 = vsyncpa [#allocation10], 1
    %1232 = vsyncpa [#allocation8], 1
    %s1233 = scalar_lea.sflag [#allocation8], 1
    %1234 = vsyncpa %s1233, 1

</llo_original>
